<compile_context>
chip_gen: v7x
topology: tpu7x:2x2x1
jax: 0.10.0
libtpu: 0.0.40
codegen_flags: <defaults>
</compile_context>

<pallas_src>
import jax
import jax.numpy as jnp
from jax.experimental import pallas as pl
from jax.experimental.pallas import tpu as pltpu


# -----------------------------------------------------------------------------
# Fused kernel: conv+ReLU -> fused mu/logvar heads -> reparameterize -> decoder
# -> KL.  Everything between the input patches and (x_hat, kl) stays in VMEM.
# -----------------------------------------------------------------------------
def _fused_vae_kernel(patches_ref, cw_ref, cb_ref, wh_ref, bh_ref,
                      eps_ref, dw_ref, db_ref,
                      xhat_ref, kl_ref, conv_ref, heads_ref):
    # patches: (B, K=Cin*KH*KW, HW)   cw: (Cenc, K)   cb: (Cenc, 1)
    # wh:      (Cenc, HW, 2Z)         bh: (1, 2Z)     eps: (B, Z)
    # dw:      (Z, OUT)               db: (1, OUT)
    # outputs: xhat (B, OUT), kl (B, 128)
    # scratch: conv (B*Cenc, HW) batch-major rows; heads (B, 2Z) accumulator
    B = patches_ref.shape[0]
    C_enc = cw_ref.shape[0]
    Z = eps_ref.shape[1]

    # --- encoder conv as one (Cenc, K) @ (K, HW) matmul + bias + ReLU per batch
    #     row.  Rows = channel, lanes = h*Wo+w (PyTorch NCHW .view(B,-1) order);
    #     stored batch-major so all later reads are static contiguous slices.
    for b in range(B):                                    # tiny static batch
        conv_ref[b * C_enc:(b + 1) * C_enc, :] = jnp.maximum(
            jnp.dot(cw_ref[...], patches_ref[b],
                    preferred_element_type=jnp.float32) + cb_ref[...],
            0.0)

    # --- fused mu|logvar heads: contract the (channel, hw) feature index as a
    #     sum over channels of (B, HW) @ (HW, 2Z) dots, accumulated in-place in
    #     an f32 scratch (MRB-friendly accumulate on v7x, fewer pops elsewhere).
    heads_ref[...] = jnp.broadcast_to(bh_ref[...], heads_ref.shape)
    for c in range(C_enc):                                # static unroll (8)
        rows = [conv_ref[b * C_enc + c:b * C_enc + c + 1, :] for b in range(B)]
        lhs = rows[0] if B == 1 else jnp.concatenate(rows, axis=0)   # (B, HW)
        heads_ref[...] += jnp.dot(lhs, wh_ref[c],
                                  preferred_element_type=jnp.float32)

    heads = heads_ref[...]                                # (B, 2Z)
    mu = heads[:, :Z]
    lv = heads[:, Z:]

    # --- reparameterize + decoder (ConvTranspose2d on 1x1 == linear map):
    #     ONE (B, Z) @ (Z, OUT) matmul, single unmasked lane-dense store.
    z = mu + eps_ref[...] * jnp.exp(0.5 * lv)
    xhat_ref[...] = (jnp.dot(z, dw_ref[...], preferred_element_type=jnp.float32)
                     + db_ref[...])

    # --- KL divergence, one lane-broadcast full-ref store (wrapper takes col 0)
    kl = -0.5 * jnp.sum(1.0 + lv - mu * mu - jnp.exp(lv),
                        axis=-1, keepdims=True)           # (B, 1)
    kl_ref[...] = jnp.broadcast_to(kl, kl_ref.shape)


# -----------------------------------------------------------------------------
# Forward wrapper (im2col glue in XLA, everything else in the fused kernel)
# -----------------------------------------------------------------------------
def vae_forward(x, kp, eps, *, dec_spatial=(16, 16)):
    """x: (B, C_in, H, W) f32 NCHW; kp: prepare_params() output; eps: (B, Z).

    Returns (x_hat (B, C_dec, Hd, Wd), kl (B,)).
    """
    B, C_in, H, W = x.shape
    KH = KW = 3
    stride = 2
    Ho, Wo = H // stride, W // stride
    HW = Ho * Wo
    C_enc = kp["conv_w"].shape[0]
    Z = eps.shape[1]
    OUT = kp["dec_w"].shape[1]
    Hd, Wd = dec_spatial
    C_dec = OUT // (Hd * Wd)
    KL_LANES = 128

    # im2col: (B, C_in*KH*KW, Ho*Wo); rows ordered (ci, kh, kw) to match the
    # flattened PyTorch OIHW conv weight, lanes ordered (h, w).
    # TODO(synk): moving this in-kernel (padded x as a VMEM operand + strided
    # reads) needs lane-strided loads and sublane->lane reshapes that Mosaic
    # does not reliably lower; kept as one small wrapper-side XLA fusion.
    x_pad = jnp.pad(x, ((0, 0), (0, 0), (1, 1), (1, 1)))
    cols = []
    for kh in range(KH):
        for kw in range(KW):
            cols.append(x_pad[:, :, kh:kh + stride * Ho:stride,
                              kw:kw + stride * Wo:stride])
    patches = jnp.stack(cols, axis=2).reshape(B, C_in * KH * KW, HW)
    patches = patches.astype(jnp.float32)

    operands = (patches, kp["conv_w"], kp["conv_b"], kp["w_heads"],
                kp["b_heads"], eps, kp["dec_w"], kp["dec_b"])
    flops = 2 * (B * C_enc * (C_in * KH * KW) * HW       # encoder conv
                 + C_enc * B * HW * (2 * Z)              # fused heads
                 + B * Z * OUT)                          # decoder
    bytes_accessed = (sum(int(a.size) * 4 for a in operands)
                      + (B * OUT + B * KL_LANES) * 4)

    x_hat_flat, kl2d = pl.pallas_call(
        _fused_vae_kernel,
        out_shape=(jax.ShapeDtypeStruct((B, OUT), jnp.float32),
                   jax.ShapeDtypeStruct((B, KL_LANES), jnp.float32)),
        scratch_shapes=[pltpu.VMEM((B * C_enc, HW), jnp.float32),
                        pltpu.VMEM((B, 2 * Z), jnp.float32)],
        cost_estimate=pl.CostEstimate(flops=flops,
                                      transcendentals=2 * B * Z,
                                      bytes_accessed=bytes_accessed),
    )(*operands)

    x_hat = x_hat_flat.reshape(B, C_dec, Hd, Wd)
    kl = kl2d[:, 0]
    return x_hat, kl


# -----------------------------------------------------------------------------
# Parameters: torch-layout init + ONE-TIME kernel-layout preparation
# -----------------------------------------------------------------------------
def make_params(key):
    C_in, C_enc, Z = 4, 8, 32
    F = C_enc * 8 * 8                      # encoder output flattened: 512
    C_dec, Hd, Wd = 4, 16, 16
    ks = jax.random.split(key, 8)
    scale = 0.05
    return {
        "conv_w": scale * jax.random.normal(ks[0], (C_enc, C_in, 3, 3), jnp.float32),
        "conv_b": scale * jax.random.normal(ks[1], (C_enc,), jnp.float32),
        "wmu": scale * jax.random.normal(ks[2], (F, Z), jnp.float32),
        "bmu": scale * jax.random.normal(ks[3], (Z,), jnp.float32),
        "wlv": scale * jax.random.normal(ks[4], (F, Z), jnp.float32),
        "blv": scale * jax.random.normal(ks[5], (Z,), jnp.float32),
        "deconv_w": scale * jax.random.normal(ks[6], (Z, C_dec, Hd, Wd), jnp.float32),
        "deconv_b": scale * jax.random.normal(ks[7], (C_dec,), jnp.float32),
    }


def prepare_params(p):
    """One-time layout prep of torch-layout params for the fused kernel."""
    C_enc, C_in, KH, KW = p["conv_w"].shape
    F, Z = p["wmu"].shape
    Zd, C_dec, Hd, Wd = p["deconv_w"].shape
    HW = F // C_enc
    # fused mu|logvar head: (C_enc, HW, 2Z) weights, (1, 2Z) bias
    w_heads = jnp.concatenate([p["wmu"].reshape(C_enc, HW, Z),
                               p["wlv"].reshape(C_enc, HW, Z)], axis=-1)
    b_heads = jnp.concatenate([p["bmu"], p["blv"]]).reshape(1, 2 * Z)
    return {
        "conv_w": p["conv_w"].reshape(C_enc, C_in * KH * KW),        # (8, 36)
        "conv_b": p["conv_b"].reshape(C_enc, 1),                     # (8, 1)
        "w_heads": w_heads,                                          # (8, 64, 64)
        "b_heads": b_heads,                                          # (1, 64)
        "dec_w":  p["deconv_w"].reshape(Zd, C_dec * Hd * Wd),        # (32, 1024)
        "dec_b":  jnp.repeat(p["deconv_b"], Hd * Wd).reshape(1, C_dec * Hd * Wd),
    }


# -----------------------------------------------------------------------------
# Pure-JAX reference (XLA) of the same VAE, for correctness checking
# -----------------------------------------------------------------------------
def vae_forward_ref(x, p, eps):
    conv = jax.lax.conv_general_dilated(
        x, p["conv_w"], window_strides=(2, 2), padding=((1, 1), (1, 1)),
        dimension_numbers=("NCHW", "OIHW", "NCHW"))
    conv = jnp.maximum(conv + p["conv_b"][None, :, None, None], 0.0)
    feat = conv.reshape(x.shape[0], -1)
    mu = feat @ p["wmu"] + p["bmu"]
    lv = feat @ p["wlv"] + p["blv"]
    z = mu + eps * jnp.exp(0.5 * lv)
    x_hat = (jnp.einsum("bz,zchw->bchw", z, p["deconv_w"])
             + p["deconv_b"][None, :, None, None])
    kl = -0.5 * jnp.sum(1.0 + lv - mu * mu - jnp.exp(lv), axis=-1)
    return x_hat, kl


if __name__ == "__main__":
    key = jax.random.PRNGKey(0)
    k_x, k_p, k_eps = jax.random.split(key, 3)

    B, C_in, H, W = 2, 4, 16, 16
    Z = 32
    x = jax.random.normal(k_x, (B, C_in, H, W), jnp.float32)
    params = make_params(k_p)
    kparams = prepare_params(params)       # one-time layout prep, not per call
    # reparameterization noise (torch.randn_like(std)) -- deterministic here
    eps = jax.random.normal(k_eps, (B, Z), jnp.float32)

    fwd = jax.jit(vae_forward)
    x_hat, kl = fwd(x, kparams, eps)
    jax.block_until_ready((x_hat, kl))

    assert x_hat.shape == (B, 4, 16, 16) and kl.shape == (B,)
    assert bool(jnp.all(jnp.isfinite(x_hat))) and bool(jnp.all(jnp.isfinite(kl)))

    # numerical check against the pure-JAX reference
    x_hat_r, kl_r = jax.jit(vae_forward_ref)(x, params, eps)
    assert bool(jnp.allclose(x_hat, x_hat_r, rtol=2e-2, atol=2e-2))
    assert bool(jnp.allclose(kl, kl_r, rtol=2e-2, atol=5e-2))

    print("KERNEL_OK")
</pallas_src>

<mosaic_0001>
module attributes {stable_mosaic.version = 11 : i64} {
  func.func @_fused_vae_kernel(%arg0: memref<2x36x64xf32, #tpu.memory_space<vmem>>, %arg1: memref<8x36xf32, #tpu.memory_space<vmem>>, %arg2: memref<8x1xf32, #tpu.memory_space<vmem>>, %arg3: memref<8x64x64xf32, #tpu.memory_space<vmem>>, %arg4: memref<1x64xf32, #tpu.memory_space<vmem>>, %arg5: memref<2x32xf32, #tpu.memory_space<vmem>>, %arg6: memref<32x1024xf32, #tpu.memory_space<vmem>>, %arg7: memref<1x1024xf32, #tpu.memory_space<vmem>>, %arg8: memref<2x1024xf32, #tpu.memory_space<vmem>>, %arg9: memref<2x128xf32, #tpu.memory_space<vmem>>, %arg10: memref<16x64xf32, #tpu.memory_space<vmem>>, %arg11: memref<2x64xf32, #tpu.memory_space<vmem>>) attributes {dimension_semantics = [], scalar_prefetch = 0 : i64, scratch_operands = 2 : i64, tpu.core_type = #tpu.core_type<tc>} {
    %c0 = arith.constant 0 : index
    %c0_0 = arith.constant 0 : index
    %0 = vector.load %arg1[%c0, %c0_0] : memref<8x36xf32, #tpu.memory_space<vmem>>, vector<8x36xf32>
    %c0_1 = arith.constant 0 : index
    %c0_2 = arith.constant 0 : index
    %c0_3 = arith.constant 0 : index
    %1 = vector.load %arg0[%c0_1, %c0_2, %c0_3] : memref<2x36x64xf32, #tpu.memory_space<vmem>>, vector<1x36x64xf32>
    %2 = vector.shape_cast %1 : vector<1x36x64xf32> to vector<36x64xf32>
    %cst = arith.constant dense<0.000000e+00> : vector<8x64xf32>
    %3 = tpu.matmul %0, %2, %cst {dimension_numbers = #tpu.dot_dimension_numbers<[1], [0], [0], [1], [0, 0, 1, 1], [], []>} : vector<8x36xf32>, vector<36x64xf32>, vector<8x64xf32> -> vector<8x64xf32>
    %c0_4 = arith.constant 0 : index
    %c0_5 = arith.constant 0 : index
    %4 = vector.load %arg2[%c0_4, %c0_5] : memref<8x1xf32, #tpu.memory_space<vmem>>, vector<8x1xf32>
    %5 = vector.broadcast %4 : vector<8x1xf32> to vector<8x64xf32>
    %6 = arith.addf %3, %5 : vector<8x64xf32>
    %cst_6 = arith.constant 0.000000e+00 : f32
    %7 = vector.broadcast %cst_6 : f32 to vector<8x64xf32>
    %8 = arith.maximumf %6, %7 : vector<8x64xf32>
    %c0_7 = arith.constant 0 : index
    %c0_8 = arith.constant 0 : index
    %9 = vector.load %arg10[%c0_7, %c0_8] : memref<16x64xf32, #tpu.memory_space<vmem>>, vector<8x64xf32>
    tpu.vector_store %arg10[%c0_7, %c0_8], %8 {strides = array<i32>} : memref<16x64xf32, #tpu.memory_space<vmem>>, vector<8x64xf32>,
    %c0_9 = arith.constant 0 : index
    %c0_10 = arith.constant 0 : index
    %10 = vector.load %arg1[%c0_9, %c0_10] : memref<8x36xf32, #tpu.memory_space<vmem>>, vector<8x36xf32>
    %c1 = arith.constant 1 : index
    %c0_11 = arith.constant 0 : index
    %c0_12 = arith.constant 0 : index
    %11 = vector.load %arg0[%c1, %c0_11, %c0_12] : memref<2x36x64xf32, #tpu.memory_space<vmem>>, vector<1x36x64xf32>
    %12 = vector.shape_cast %11 : vector<1x36x64xf32> to vector<36x64xf32>
    %cst_13 = arith.constant dense<0.000000e+00> : vector<8x64xf32>
    %13 = tpu.matmul %10, %12, %cst_13 {dimension_numbers = #tpu.dot_dimension_numbers<[1], [0], [0], [1], [0, 0, 1, 1], [], []>} : vector<8x36xf32>, vector<36x64xf32>, vector<8x64xf32> -> vector<8x64xf32>
    %c0_14 = arith.constant 0 : index
    %c0_15 = arith.constant 0 : index
    %14 = vector.load %arg2[%c0_14, %c0_15] : memref<8x1xf32, #tpu.memory_space<vmem>>, vector<8x1xf32>
    %15 = vector.broadcast %14 : vector<8x1xf32> to vector<8x64xf32>
    %16 = arith.addf %13, %15 : vector<8x64xf32>
    %cst_16 = arith.constant 0.000000e+00 : f32
    %17 = vector.broadcast %cst_16 : f32 to vector<8x64xf32>
    %18 = arith.maximumf %16, %17 : vector<8x64xf32>
    %c8 = arith.constant 8 : index
    %c0_17 = arith.constant 0 : index
    %19 = vector.load %arg10[%c8, %c0_17] : memref<16x64xf32, #tpu.memory_space<vmem>>, vector<8x64xf32>
    tpu.vector_store %arg10[%c8, %c0_17], %18 {strides = array<i32>} : memref<16x64xf32, #tpu.memory_space<vmem>>, vector<8x64xf32>,
    %c0_18 = arith.constant 0 : index
    %c0_19 = arith.constant 0 : index
    %20 = vector.load %arg4[%c0_18, %c0_19] : memref<1x64xf32, #tpu.memory_space<vmem>>, vector<1x64xf32>
    %21 = vector.shape_cast %20 : vector<1x64xf32> to vector<1x64xf32>
    %22 = vector.broadcast %21 : vector<1x64xf32> to vector<2x64xf32>
    %c0_20 = arith.constant 0 : index
    %c0_21 = arith.constant 0 : index
    %23 = vector.load %arg11[%c0_20, %c0_21] : memref<2x64xf32, #tpu.memory_space<vmem>>, vector<2x64xf32>
    tpu.vector_store %arg11[%c0_20, %c0_21], %22 {strides = array<i32>} : memref<2x64xf32, #tpu.memory_space<vmem>>, vector<2x64xf32>,
    %c0_22 = arith.constant 0 : index
    %c0_23 = arith.constant 0 : index
    %24 = vector.load %arg10[%c0_22, %c0_23] : memref<16x64xf32, #tpu.memory_space<vmem>>, vector<1x64xf32>
    %c8_24 = arith.constant 8 : index
    %c0_25 = arith.constant 0 : index
    %25 = vector.load %arg10[%c8_24, %c0_25] : memref<16x64xf32, #tpu.memory_space<vmem>>, vector<1x64xf32>
    %26 = tpu.concatenate %24, %25 in 0 : vector<1x64xf32>, vector<1x64xf32> -> vector<2x64xf32>
    %c0_26 = arith.constant 0 : index
    %c0_27 = arith.constant 0 : index
    %27 = vector.load %arg11[%c0_26, %c0_27] : memref<2x64xf32, #tpu.memory_space<vmem>>, vector<2x64xf32>
    %c0_28 = arith.constant 0 : index
    %c0_29 = arith.constant 0 : index
    %c0_30 = arith.constant 0 : index
    %28 = vector.load %arg3[%c0_28, %c0_29, %c0_30] : memref<8x64x64xf32, #tpu.memory_space<vmem>>, vector<1x64x64xf32>
    %29 = vector.shape_cast %28 : vector<1x64x64xf32> to vector<64x64xf32>
    %cst_31 = arith.constant dense<0.000000e+00> : vector<2x64xf32>
    %30 = tpu.matmul %26, %29, %cst_31 {dimension_numbers = #tpu.dot_dimension_numbers<[1], [0], [0], [1], [0, 0, 1, 1], [], []>} : vector<2x64xf32>, vector<64x64xf32>, vector<2x64xf32> -> vector<2x64xf32>
    %31 = arith.addf %27, %30 : vector<2x64xf32>
    %c0_32 = arith.constant 0 : index
    %c0_33 = arith.constant 0 : index
    %32 = vector.load %arg11[%c0_32, %c0_33] : memref<2x64xf32, #tpu.memory_space<vmem>>, vector<2x64xf32>
    tpu.vector_store %arg11[%c0_32, %c0_33], %31 {strides = array<i32>} : memref<2x64xf32, #tpu.memory_space<vmem>>, vector<2x64xf32>,
    %c1_34 = arith.constant 1 : index
    %c0_35 = arith.constant 0 : index
    %33 = vector.load %arg10[%c1_34, %c0_35] : memref<16x64xf32, #tpu.memory_space<vmem>>, vector<1x64xf32>
    %c9 = arith.constant 9 : index
    %c0_36 = arith.constant 0 : index
    %34 = vector.load %arg10[%c9, %c0_36] : memref<16x64xf32, #tpu.memory_space<vmem>>, vector<1x64xf32>
    %35 = tpu.concatenate %33, %34 in 0 : vector<1x64xf32>, vector<1x64xf32> -> vector<2x64xf32>
    %c0_37 = arith.constant 0 : index
    %c0_38 = arith.constant 0 : index
    %36 = vector.load %arg11[%c0_37, %c0_38] : memref<2x64xf32, #tpu.memory_space<vmem>>, vector<2x64xf32>
    %c1_39 = arith.constant 1 : index
    %c0_40 = arith.constant 0 : index
    %c0_41 = arith.constant 0 : index
    %37 = vector.load %arg3[%c1_39, %c0_40, %c0_41] : memref<8x64x64xf32, #tpu.memory_space<vmem>>, vector<1x64x64xf32>
    %38 = vector.shape_cast %37 : vector<1x64x64xf32> to vector<64x64xf32>
    %cst_42 = arith.constant dense<0.000000e+00> : vector<2x64xf32>
    %39 = tpu.matmul %35, %38, %cst_42 {dimension_numbers = #tpu.dot_dimension_numbers<[1], [0], [0], [1], [0, 0, 1, 1], [], []>} : vector<2x64xf32>, vector<64x64xf32>, vector<2x64xf32> -> vector<2x64xf32>
    %40 = arith.addf %36, %39 : vector<2x64xf32>
    %c0_43 = arith.constant 0 : index
    %c0_44 = arith.constant 0 : index
    %41 = vector.load %arg11[%c0_43, %c0_44] : memref<2x64xf32, #tpu.memory_space<vmem>>, vector<2x64xf32>
    tpu.vector_store %arg11[%c0_43, %c0_44], %40 {strides = array<i32>} : memref<2x64xf32, #tpu.memory_space<vmem>>, vector<2x64xf32>,
    %c2 = arith.constant 2 : index
    %c0_45 = arith.constant 0 : index
    %42 = vector.load %arg10[%c2, %c0_45] : memref<16x64xf32, #tpu.memory_space<vmem>>, vector<1x64xf32>
    %c10 = arith.constant 10 : index
    %c0_46 = arith.constant 0 : index
    %43 = vector.load %arg10[%c10, %c0_46] : memref<16x64xf32, #tpu.memory_space<vmem>>, vector<1x64xf32>
    %44 = tpu.concatenate %42, %43 in 0 : vector<1x64xf32>, vector<1x64xf32> -> vector<2x64xf32>
    %c0_47 = arith.constant 0 : index
    %c0_48 = arith.constant 0 : index
    %45 = vector.load %arg11[%c0_47, %c0_48] : memref<2x64xf32, #tpu.memory_space<vmem>>, vector<2x64xf32>
    %c2_49 = arith.constant 2 : index
    %c0_50 = arith.constant 0 : index
    %c0_51 = arith.constant 0 : index
    %46 = vector.load %arg3[%c2_49, %c0_50, %c0_51] : memref<8x64x64xf32, #tpu.memory_space<vmem>>, vector<1x64x64xf32>
    %47 = vector.shape_cast %46 : vector<1x64x64xf32> to vector<64x64xf32>
    %cst_52 = arith.constant dense<0.000000e+00> : vector<2x64xf32>
    %48 = tpu.matmul %44, %47, %cst_52 {dimension_numbers = #tpu.dot_dimension_numbers<[1], [0], [0], [1], [0, 0, 1, 1], [], []>} : vector<2x64xf32>, vector<64x64xf32>, vector<2x64xf32> -> vector<2x64xf32>
    %49 = arith.addf %45, %48 : vector<2x64xf32>
    %c0_53 = arith.constant 0 : index
    %c0_54 = arith.constant 0 : index
    %50 = vector.load %arg11[%c0_53, %c0_54] : memref<2x64xf32, #tpu.memory_space<vmem>>, vector<2x64xf32>
    tpu.vector_store %arg11[%c0_53, %c0_54], %49 {strides = array<i32>} : memref<2x64xf32, #tpu.memory_space<vmem>>, vector<2x64xf32>,
    %c3 = arith.constant 3 : index
    %c0_55 = arith.constant 0 : index
    %51 = vector.load %arg10[%c3, %c0_55] : memref<16x64xf32, #tpu.memory_space<vmem>>, vector<1x64xf32>
    %c11 = arith.constant 11 : index
    %c0_56 = arith.constant 0 : index
    %52 = vector.load %arg10[%c11, %c0_56] : memref<16x64xf32, #tpu.memory_space<vmem>>, vector<1x64xf32>
    %53 = tpu.concatenate %51, %52 in 0 : vector<1x64xf32>, vector<1x64xf32> -> vector<2x64xf32>
    %c0_57 = arith.constant 0 : index
    %c0_58 = arith.constant 0 : index
    %54 = vector.load %arg11[%c0_57, %c0_58] : memref<2x64xf32, #tpu.memory_space<vmem>>, vector<2x64xf32>
    %c3_59 = arith.constant 3 : index
    %c0_60 = arith.constant 0 : index
    %c0_61 = arith.constant 0 : index
    %55 = vector.load %arg3[%c3_59, %c0_60, %c0_61] : memref<8x64x64xf32, #tpu.memory_space<vmem>>, vector<1x64x64xf32>
    %56 = vector.shape_cast %55 : vector<1x64x64xf32> to vector<64x64xf32>
    %cst_62 = arith.constant dense<0.000000e+00> : vector<2x64xf32>
    %57 = tpu.matmul %53, %56, %cst_62 {dimension_numbers = #tpu.dot_dimension_numbers<[1], [0], [0], [1], [0, 0, 1, 1], [], []>} : vector<2x64xf32>, vector<64x64xf32>, vector<2x64xf32> -> vector<2x64xf32>
    %58 = arith.addf %54, %57 : vector<2x64xf32>
    %c0_63 = arith.constant 0 : index
    %c0_64 = arith.constant 0 : index
    %59 = vector.load %arg11[%c0_63, %c0_64] : memref<2x64xf32, #tpu.memory_space<vmem>>, vector<2x64xf32>
    tpu.vector_store %arg11[%c0_63, %c0_64], %58 {strides = array<i32>} : memref<2x64xf32, #tpu.memory_space<vmem>>, vector<2x64xf32>,
    %c4 = arith.constant 4 : index
    %c0_65 = arith.constant 0 : index
    %60 = vector.load %arg10[%c4, %c0_65] : memref<16x64xf32, #tpu.memory_space<vmem>>, vector<1x64xf32>
    %c12 = arith.constant 12 : index
    %c0_66 = arith.constant 0 : index
    %61 = vector.load %arg10[%c12, %c0_66] : memref<16x64xf32, #tpu.memory_space<vmem>>, vector<1x64xf32>
    %62 = tpu.concatenate %60, %61 in 0 : vector<1x64xf32>, vector<1x64xf32> -> vector<2x64xf32>
    %c0_67 = arith.constant 0 : index
    %c0_68 = arith.constant 0 : index
    %63 = vector.load %arg11[%c0_67, %c0_68] : memref<2x64xf32, #tpu.memory_space<vmem>>, vector<2x64xf32>
    %c4_69 = arith.constant 4 : index
    %c0_70 = arith.constant 0 : index
    %c0_71 = arith.constant 0 : index
    %64 = vector.load %arg3[%c4_69, %c0_70, %c0_71] : memref<8x64x64xf32, #tpu.memory_space<vmem>>, vector<1x64x64xf32>
    %65 = vector.shape_cast %64 : vector<1x64x64xf32> to vector<64x64xf32>
    %cst_72 = arith.constant dense<0.000000e+00> : vector<2x64xf32>
    %66 = tpu.matmul %62, %65, %cst_72 {dimension_numbers = #tpu.dot_dimension_numbers<[1], [0], [0], [1], [0, 0, 1, 1], [], []>} : vector<2x64xf32>, vector<64x64xf32>, vector<2x64xf32> -> vector<2x64xf32>
    %67 = arith.addf %63, %66 : vector<2x64xf32>
    %c0_73 = arith.constant 0 : index
    %c0_74 = arith.constant 0 : index
    %68 = vector.load %arg11[%c0_73, %c0_74] : memref<2x64xf32, #tpu.memory_space<vmem>>, vector<2x64xf32>
    tpu.vector_store %arg11[%c0_73, %c0_74], %67 {strides = array<i32>} : memref<2x64xf32, #tpu.memory_space<vmem>>, vector<2x64xf32>,
    %c5 = arith.constant 5 : index
    %c0_75 = arith.constant 0 : index
    %69 = vector.load %arg10[%c5, %c0_75] : memref<16x64xf32, #tpu.memory_space<vmem>>, vector<1x64xf32>
    %c13 = arith.constant 13 : index
    %c0_76 = arith.constant 0 : index
    %70 = vector.load %arg10[%c13, %c0_76] : memref<16x64xf32, #tpu.memory_space<vmem>>, vector<1x64xf32>
    %71 = tpu.concatenate %69, %70 in 0 : vector<1x64xf32>, vector<1x64xf32> -> vector<2x64xf32>
    %c0_77 = arith.constant 0 : index
    %c0_78 = arith.constant 0 : index
    %72 = vector.load %arg11[%c0_77, %c0_78] : memref<2x64xf32, #tpu.memory_space<vmem>>, vector<2x64xf32>
    %c5_79 = arith.constant 5 : index
    %c0_80 = arith.constant 0 : index
    %c0_81 = arith.constant 0 : index
    %73 = vector.load %arg3[%c5_79, %c0_80, %c0_81] : memref<8x64x64xf32, #tpu.memory_space<vmem>>, vector<1x64x64xf32>
    %74 = vector.shape_cast %73 : vector<1x64x64xf32> to vector<64x64xf32>
    %cst_82 = arith.constant dense<0.000000e+00> : vector<2x64xf32>
    %75 = tpu.matmul %71, %74, %cst_82 {dimension_numbers = #tpu.dot_dimension_numbers<[1], [0], [0], [1], [0, 0, 1, 1], [], []>} : vector<2x64xf32>, vector<64x64xf32>, vector<2x64xf32> -> vector<2x64xf32>
    %76 = arith.addf %72, %75 : vector<2x64xf32>
    %c0_83 = arith.constant 0 : index
    %c0_84 = arith.constant 0 : index
    %77 = vector.load %arg11[%c0_83, %c0_84] : memref<2x64xf32, #tpu.memory_space<vmem>>, vector<2x64xf32>
    tpu.vector_store %arg11[%c0_83, %c0_84], %76 {strides = array<i32>} : memref<2x64xf32, #tpu.memory_space<vmem>>, vector<2x64xf32>,
    %c6 = arith.constant 6 : index
    %c0_85 = arith.constant 0 : index
    %78 = vector.load %arg10[%c6, %c0_85] : memref<16x64xf32, #tpu.memory_space<vmem>>, vector<1x64xf32>
    %c14 = arith.constant 14 : index
    %c0_86 = arith.constant 0 : index
    %79 = vector.load %arg10[%c14, %c0_86] : memref<16x64xf32, #tpu.memory_space<vmem>>, vector<1x64xf32>
    %80 = tpu.concatenate %78, %79 in 0 : vector<1x64xf32>, vector<1x64xf32> -> vector<2x64xf32>
    %c0_87 = arith.constant 0 : index
    %c0_88 = arith.constant 0 : index
    %81 = vector.load %arg11[%c0_87, %c0_88] : memref<2x64xf32, #tpu.memory_space<vmem>>, vector<2x64xf32>
    %c6_89 = arith.constant 6 : index
    %c0_90 = arith.constant 0 : index
    %c0_91 = arith.constant 0 : index
    %82 = vector.load %arg3[%c6_89, %c0_90, %c0_91] : memref<8x64x64xf32, #tpu.memory_space<vmem>>, vector<1x64x64xf32>
    %83 = vector.shape_cast %82 : vector<1x64x64xf32> to vector<64x64xf32>
    %cst_92 = arith.constant dense<0.000000e+00> : vector<2x64xf32>
    %84 = tpu.matmul %80, %83, %cst_92 {dimension_numbers = #tpu.dot_dimension_numbers<[1], [0], [0], [1], [0, 0, 1, 1], [], []>} : vector<2x64xf32>, vector<64x64xf32>, vector<2x64xf32> -> vector<2x64xf32>
    %85 = arith.addf %81, %84 : vector<2x64xf32>
    %c0_93 = arith.constant 0 : index
    %c0_94 = arith.constant 0 : index
    %86 = vector.load %arg11[%c0_93, %c0_94] : memref<2x64xf32, #tpu.memory_space<vmem>>, vector<2x64xf32>
    tpu.vector_store %arg11[%c0_93, %c0_94], %85 {strides = array<i32>} : memref<2x64xf32, #tpu.memory_space<vmem>>, vector<2x64xf32>,
    %c7 = arith.constant 7 : index
    %c0_95 = arith.constant 0 : index
    %87 = vector.load %arg10[%c7, %c0_95] : memref<16x64xf32, #tpu.memory_space<vmem>>, vector<1x64xf32>
    %c15 = arith.constant 15 : index
    %c0_96 = arith.constant 0 : index
    %88 = vector.load %arg10[%c15, %c0_96] : memref<16x64xf32, #tpu.memory_space<vmem>>, vector<1x64xf32>
    %89 = tpu.concatenate %87, %88 in 0 : vector<1x64xf32>, vector<1x64xf32> -> vector<2x64xf32>
    %c0_97 = arith.constant 0 : index
    %c0_98 = arith.constant 0 : index
    %90 = vector.load %arg11[%c0_97, %c0_98] : memref<2x64xf32, #tpu.memory_space<vmem>>, vector<2x64xf32>
    %c7_99 = arith.constant 7 : index
    %c0_100 = arith.constant 0 : index
    %c0_101 = arith.constant 0 : index
    %91 = vector.load %arg3[%c7_99, %c0_100, %c0_101] : memref<8x64x64xf32, #tpu.memory_space<vmem>>, vector<1x64x64xf32>
    %92 = vector.shape_cast %91 : vector<1x64x64xf32> to vector<64x64xf32>
    %cst_102 = arith.constant dense<0.000000e+00> : vector<2x64xf32>
    %93 = tpu.matmul %89, %92, %cst_102 {dimension_numbers = #tpu.dot_dimension_numbers<[1], [0], [0], [1], [0, 0, 1, 1], [], []>} : vector<2x64xf32>, vector<64x64xf32>, vector<2x64xf32> -> vector<2x64xf32>
    %94 = arith.addf %90, %93 : vector<2x64xf32>
    %c0_103 = arith.constant 0 : index
    %c0_104 = arith.constant 0 : index
    %95 = vector.load %arg11[%c0_103, %c0_104] : memref<2x64xf32, #tpu.memory_space<vmem>>, vector<2x64xf32>
    tpu.vector_store %arg11[%c0_103, %c0_104], %94 {strides = array<i32>} : memref<2x64xf32, #tpu.memory_space<vmem>>, vector<2x64xf32>,
    %c0_105 = arith.constant 0 : index
    %c0_106 = arith.constant 0 : index
    %96 = vector.load %arg11[%c0_105, %c0_106] : memref<2x64xf32, #tpu.memory_space<vmem>>, vector<2x64xf32>
    %97 = vector.extract_strided_slice %96 {offsets = [0, 0], sizes = [2, 32], strides = [1, 1]} : vector<2x64xf32> to vector<2x32xf32>
    %98 = vector.extract_strided_slice %96 {offsets = [0, 32], sizes = [2, 32], strides = [1, 1]} : vector<2x64xf32> to vector<2x32xf32>
    %c0_107 = arith.constant 0 : index
    %c0_108 = arith.constant 0 : index
    %99 = vector.load %arg5[%c0_107, %c0_108] : memref<2x32xf32, #tpu.memory_space<vmem>>, vector<2x32xf32>
    %cst_109 = arith.constant 5.000000e-01 : f32
    %100 = vector.broadcast %cst_109 : f32 to vector<2x32xf32>
    %101 = arith.mulf %100, %98 : vector<2x32xf32>
    %102 = math.exp %101 : vector<2x32xf32>
    %103 = arith.mulf %99, %102 : vector<2x32xf32>
    %104 = arith.addf %97, %103 : vector<2x32xf32>
    %c0_110 = arith.constant 0 : index
    %c0_111 = arith.constant 0 : index
    %105 = vector.load %arg6[%c0_110, %c0_111] : memref<32x1024xf32, #tpu.memory_space<vmem>>, vector<32x1024xf32>
    %cst_112 = arith.constant dense<0.000000e+00> : vector<2x1024xf32>
    %106 = tpu.matmul %104, %105, %cst_112 {dimension_numbers = #tpu.dot_dimension_numbers<[1], [0], [0], [1], [0, 0, 1, 1], [], []>} : vector<2x32xf32>, vector<32x1024xf32>, vector<2x1024xf32> -> vector<2x1024xf32>
    %c0_113 = arith.constant 0 : index
    %c0_114 = arith.constant 0 : index
    %107 = vector.load %arg7[%c0_113, %c0_114] : memref<1x1024xf32, #tpu.memory_space<vmem>>, vector<1x1024xf32>
    %108 = vector.broadcast %107 : vector<1x1024xf32> to vector<2x1024xf32>
    %109 = arith.addf %106, %108 : vector<2x1024xf32>
    %c0_115 = arith.constant 0 : index
    %c0_116 = arith.constant 0 : index
    %110 = vector.load %arg8[%c0_115, %c0_116] : memref<2x1024xf32, #tpu.memory_space<vmem>>, vector<2x1024xf32>
    tpu.vector_store %arg8[%c0_115, %c0_116], %109 {strides = array<i32>} : memref<2x1024xf32, #tpu.memory_space<vmem>>, vector<2x1024xf32>,
    %cst_117 = arith.constant 1.000000e+00 : f32
    %111 = vector.broadcast %cst_117 : f32 to vector<2x32xf32>
    %112 = arith.addf %111, %98 : vector<2x32xf32>
    %113 = arith.mulf %97, %97 : vector<2x32xf32>
    %114 = arith.subf %112, %113 : vector<2x32xf32>
    %115 = math.exp %98 : vector<2x32xf32>
    %116 = arith.subf %114, %115 : vector<2x32xf32>
    %cst_118 = arith.constant dense<0.000000e+00> : vector<2xf32>
    %117 = vector.multi_reduction <add>, %116, %cst_118 [1] : vector<2x32xf32> to vector<2xf32>
    %118 = vector.shape_cast %117 : vector<2xf32> to vector<2x1xf32>
    %cst_119 = arith.constant -5.000000e-01 : f32
    %119 = vector.broadcast %cst_119 : f32 to vector<2x1xf32>
    %120 = arith.mulf %119, %118 : vector<2x1xf32>
    %121 = vector.shape_cast %120 : vector<2x1xf32> to vector<2x1xf32>
    %122 = vector.broadcast %121 : vector<2x1xf32> to vector<2x128xf32>
    %c0_120 = arith.constant 0 : index
    %c0_121 = arith.constant 0 : index
    %123 = vector.load %arg9[%c0_120, %c0_121] : memref<2x128xf32, #tpu.memory_space<vmem>>, vector<2x128xf32>
    tpu.vector_store %arg9[%c0_120, %c0_121], %122 {strides = array<i32>} : memref<2x128xf32, #tpu.memory_space<vmem>>, vector<2x128xf32>,
    return
  }
}

</mosaic_0001>

<llo_original>
// kernel: vae_forward.1
$region0: #{vae_forward.1}
  #allocation0 [shape = 'u32[]', space=smem, size = 0x4, offset = 0x4, fixed_abs, tag = 'smem constant byte address 0x4 - core index']
  #allocation1 [shape = 'u32[144,128]{1,0:T(1,128)}', space=vmem, size = 0x12000, scoped, tag = 'internal scratch']
  #allocation2 [shape = 'f32[16,64]{1,0:T(8,128)}', space=vmem, size = 0x2000, scoped, tag = 'scratch operand']
  #allocation3 [shape = 'f32[2,64]{1,0:T(2,128)}', space=vmem, size = 0x400, scoped, tag = 'scratch operand']
  %s0 = inlined_call_operand.vmem [shape: f32[2,36,64], index: 0, kind: input, shape index: {}]
  %s1 = inlined_call_operand.vmem [shape: f32[8,36], index: 1, kind: input, shape index: {}]
  %s2 = inlined_call_operand.vmem [shape: f32[8,1], index: 2, kind: input, shape index: {}]
  %s3 = inlined_call_operand.vmem [shape: f32[8,64,64], index: 3, kind: input, shape index: {}]
  %s4 = inlined_call_operand.vmem [shape: f32[1,64], index: 4, kind: input, shape index: {}]
  %s5 = inlined_call_operand.vmem [shape: f32[2,32], index: 5, kind: input, shape index: {}]
  %s6 = inlined_call_operand.vmem [shape: f32[32,1024], index: 6, kind: input, shape index: {}]
  %s7 = inlined_call_operand.vmem [shape: f32[1,1024], index: 7, kind: input, shape index: {}]
  %s8 = inlined_call_operand.vmem [shape: f32[2,1024], index: 8, kind: output, shape index: {0}]
  %s9 = inlined_call_operand.vmem [shape: f32[2,128], index: 9, kind: output, shape index: {1}]
  %10 = xla_tuple %s8, %s9
  %s11 = sld [smem:[#allocation0]]
  $region50: #{vae_forward.1} parent=0
    _
  %s13 = ssub.s32 1, %s11
  %s14 = scalar_select 0, %s13, %s11
  // Predicated region
  $region2: #{vae_forward.1} parent=0 // pred_check
    _
  $region3: #{vae_forward.1} parent=0 // pred_check_branch
    %16 = sbr.rel (0) target = $region5
  $region4: #{vae_forward.1} parent=0 // pred_region
    _
  $region5: #{vae_forward.1} parent=0 // pred_fallthru
    _
  // Predicated region
  $region6: #{vae_forward.1} parent=0 // pred_check
    _
  $region7: #{vae_forward.1} parent=0 // pred_check_branch
    %18 = sbr.rel (0) target = $region9
  $region8: #{vae_forward.1} parent=0 // pred_region
    _
  $region9: #{vae_forward.1} parent=0 // pred_fallthru
    _
  // Predicated region
  $region10: #{vae_forward.1} parent=0 // pred_check
    _
  $region11: #{vae_forward.1} parent=0 // pred_check_branch
    %20 = sbr.rel (0) target = $region13
  $region12: #{vae_forward.1} parent=0 // pred_region
    _
  $region13: #{vae_forward.1} parent=0 // pred_fallthru
    _
  // Predicated region
  $region14: #{vae_forward.1} parent=0 // pred_check
    _
  $region15: #{vae_forward.1} parent=0 // pred_check_branch
    %22 = sbr.rel (0) target = $region17
  $region16: #{vae_forward.1} parent=0 // pred_region
    _
  $region17: #{vae_forward.1} parent=0 // pred_fallthru
    _
  // Predicated region
  $region18: #{vae_forward.1} parent=0 // pred_check
    _
  $region19: #{vae_forward.1} parent=0 // pred_check_branch
    %24 = sbr.rel (0) target = $region21
  $region20: #{vae_forward.1} parent=0 // pred_region
    _
  $region21: #{vae_forward.1} parent=0 // pred_fallthru
    _
  // Predicated region
  $region22: #{vae_forward.1} parent=0 // pred_check
    _
  $region23: #{vae_forward.1} parent=0 // pred_check_branch
    %26 = sbr.rel (0) target = $region25
  $region24: #{vae_forward.1} parent=0 // pred_region
    _
  $region25: #{vae_forward.1} parent=0 // pred_fallthru
    _
  // Predicated region
  $region26: #{vae_forward.1} parent=0 // pred_check
    _
  $region27: #{vae_forward.1} parent=0 // pred_check_branch
    %28 = sbr.rel (0) target = $region29
  $region28: #{vae_forward.1} parent=0 // pred_region
    _
  $region29: #{vae_forward.1} parent=0 // pred_fallthru
    _
  // Predicated region
  $region30: #{vae_forward.1} parent=0 // pred_check
    _
  $region31: #{vae_forward.1} parent=0 // pred_check_branch
    %30 = sbr.rel (0) target = $region33
  $region32: #{vae_forward.1} parent=0 // pred_region
    _
  $region33: #{vae_forward.1} parent=0 // pred_fallthru
    _
  %v31 = vld [vmem:[%s1] sm:$0xff]
  %v32 = vld [vmem:[%s0] sm:$0xff]
  %v33 = vld [vmem:[%s0 + $0x8] sm:$0xff]
  %v34 = vld [vmem:[%s0 + $0x10] sm:$0xff]
  %v35 = vld [vmem:[%s0 + $0x18] sm:$0xff]
  %v36 = vld [vmem:[%s0 + $0x20] sm:$0xf]
  %v37 = vld [vmem:[%s2] sm:$0xff]
  %39 = vset.pattern.permute.xlu0 0
  %40 = vperm.xlu0 %39, %v37
  %v41 = vpop.permute.xlu0 %40
  %vm43 = vcmask 293888
  %v45 = vsel %vm43, %v31, 0
  %vm47 = vcmask 1043456
  %v49 = vsel %vm47, %v36, 0
  %51 = vmatprep.subr.mxu0 0.0
  %52 = vmatpush1.msra.mxu0 %v32
  %53 = vmatprep.subr.mxu0 0.0
  %54 = vmatpush1.msra.mxu0 %v33
  %55 = vmatprep.subr.mxu0 0.0
  %56 = vmatpush1.msra.mxu0 %v34
  %57 = vmatprep.subr.mxu0 0.0
  %58 = vmatpush1.msra.mxu0 %v35
  %59 = vmatprep.subr.mxu0 0.0
  %60 = vmatpush1.msra.mxu0 %v49
  %61 = vmatprep.subr.mxu0 0.0
  %62 = vmatpush1.msra.mxu0 0.0
  %63 = vmatprep.subr.mxu0 0.0
  %64 = vmatpush1.msra.mxu0 0.0
  %65 = vmatprep.subr.mxu0 0.0
  %66 = vmatpush1.msra.mxu0 0.0
  %67 = vmatprep.subr.mxu0 0.0
  %68 = vmatpush1.msra.mxu0 0.0
  %69 = vmatprep.subr.mxu0 0.0
  %70 = vmatpush1.msra.mxu0 0.0
  %71 = vmatprep.subr.mxu0 0.0
  %72 = vmatpush1.msra.mxu0 0.0
  %73 = vmatprep.subr.mxu0 0.0
  %74 = vmatpush1.msra.mxu0 0.0
  %75 = vmatprep.subr.mxu0 0.0
  %76 = vmatpush1.msra.mxu0 0.0
  %77 = vmatprep.subr.mxu0 0.0
  %78 = vmatpush1.msra.mxu0 0.0
  %79 = vmatprep.subr.mxu0 0.0
  %80 = vmatpush1.msra.mxu0 0.0
  %81 = vmatprep.subr.mxu0 0.0
  %82 = vmatpush1.msra.mxu0 0.0
  %83 = vmatprep.subr.mxu0 0.0
  %84 = vmatpush1.msra.mxu0 0.0
  %85 = vmatprep.subr.mxu0 0.0
  %86 = vmatpush1.msra.mxu0 0.0
  %87 = vmatprep.subr.mxu0 0.0
  %88 = vmatpush1.msra.mxu0 0.0
  %89 = vmatprep.subr.mxu0 0.0
  %90 = vmatpush1.msra.mxu0 0.0
  %91 = vmatprep.subr.mxu0 0.0
  %92 = vmatpush1.msra.mxu0 0.0
  %93 = vmatprep.subr.mxu0 0.0
  %94 = vmatpush1.msra.mxu0 0.0
  %95 = vmatprep.subr.mxu0 0.0
  %96 = vmatpush1.msra.mxu0 0.0
  %97 = vmatprep.subr.mxu0 0.0
  %98 = vmatpush1.msra.mxu0 0.0
  %99 = vmatprep.subr.mxu0 0.0
  %100 = vmatpush1.msra.mxu0 0.0
  %101 = vmatprep.subr.mxu0 0.0
  %102 = vmatpush1.msra.mxu0 0.0
  %103 = vmatprep.subr.mxu0 0.0
  %104 = vmatpush1.msra.mxu0 0.0
  %105 = vmatprep.subr.mxu0 0.0
  %106 = vmatpush1.msra.mxu0 0.0
  %107 = vmatprep.subr.mxu0 0.0
  %108 = vmatpush1.msra.mxu0 0.0
  %109 = vmatprep.subr.mxu0 0.0
  %110 = vmatpush1.msra.mxu0 0.0
  %111 = vmatprep.subr.mxu0 0.0
  %112 = vmatpush1.msra.mxu0 0.0
  %113 = vmatprep.subr.mxu0 0.0
  %114 = vmatpush1.msra.mxu0 0.0
  %115 = vmatprep.mubr.f32.mxu0 0.0
  %116 = vmatmul.mubr.f32.gmra.mrb[0].mxu0 %v45
  %v117 = vpop.f32.mrb[0].mxu0
  %v118 = vadd.f32 %v41, %v117
  %v119 = vpop.f32.mrb[0].mxu0
  %120 = vdwg.mxu0
  %v121 = vmax.f32 %v118, 0.0
  %vm122 = vcmask 523264
  %123 = vst.msk [vmem:[#allocation2] sm:$0xff] %vm122, %v121
  %v124 = vld [vmem:[%s1] sm:$0xff]
  %s125 = scalar_lea.vmem %s0, 40
  %v126 = vld [vmem:[%s125] sm:$0xff]
  %v127 = vld [vmem:[%s125 + $0x8] sm:$0xff]
  %v128 = vld [vmem:[%s125 + $0x10] sm:$0xff]
  %v129 = vld [vmem:[%s125 + $0x18] sm:$0xff]
  %v130 = vld [vmem:[%s125 + $0x20] sm:$0xf]
  %v131 = vld [vmem:[%s2] sm:$0xff]
  %133 = vset.pattern.permute.xlu0 0
  %134 = vperm.xlu0 %133, %v131
  %v135 = vpop.permute.xlu0 %134
  %v138 = vsel %vm43, %v124, 0
  %v141 = vsel %vm47, %v130, 0
  %143 = vmatprep.subr.mxu0 0.0
  %144 = vmatpush1.msra.mxu0 %v126
  %145 = vmatprep.subr.mxu0 0.0
  %146 = vmatpush1.msra.mxu0 %v127
  %147 = vmatprep.subr.mxu0 0.0
  %148 = vmatpush1.msra.mxu0 %v128
  %149 = vmatprep.subr.mxu0 0.0
  %150 = vmatpush1.msra.mxu0 %v129
  %151 = vmatprep.subr.mxu0 0.0
  %152 = vmatpush1.msra.mxu0 %v141
  %153 = vmatprep.subr.mxu0 0.0
  %154 = vmatpush1.msra.mxu0 0.0
  %155 = vmatprep.subr.mxu0 0.0
  %156 = vmatpush1.msra.mxu0 0.0
  %157 = vmatprep.subr.mxu0 0.0
  %158 = vmatpush1.msra.mxu0 0.0
  %159 = vmatprep.subr.mxu0 0.0
  %160 = vmatpush1.msra.mxu0 0.0
  %161 = vmatprep.subr.mxu0 0.0
  %162 = vmatpush1.msra.mxu0 0.0
  %163 = vmatprep.subr.mxu0 0.0
  %164 = vmatpush1.msra.mxu0 0.0
  %165 = vmatprep.subr.mxu0 0.0
  %166 = vmatpush1.msra.mxu0 0.0
  %167 = vmatprep.subr.mxu0 0.0
  %168 = vmatpush1.msra.mxu0 0.0
  %169 = vmatprep.subr.mxu0 0.0
  %170 = vmatpush1.msra.mxu0 0.0
  %171 = vmatprep.subr.mxu0 0.0
  %172 = vmatpush1.msra.mxu0 0.0
  %173 = vmatprep.subr.mxu0 0.0
  %174 = vmatpush1.msra.mxu0 0.0
  %175 = vmatprep.subr.mxu0 0.0
  %176 = vmatpush1.msra.mxu0 0.0
  %177 = vmatprep.subr.mxu0 0.0
  %178 = vmatpush1.msra.mxu0 0.0
  %179 = vmatprep.subr.mxu0 0.0
  %180 = vmatpush1.msra.mxu0 0.0
  %181 = vmatprep.subr.mxu0 0.0
  %182 = vmatpush1.msra.mxu0 0.0
  %183 = vmatprep.subr.mxu0 0.0
  %184 = vmatpush1.msra.mxu0 0.0
  %185 = vmatprep.subr.mxu0 0.0
  %186 = vmatpush1.msra.mxu0 0.0
  %187 = vmatprep.subr.mxu0 0.0
  %188 = vmatpush1.msra.mxu0 0.0
  %189 = vmatprep.subr.mxu0 0.0
  %190 = vmatpush1.msra.mxu0 0.0
  %191 = vmatprep.subr.mxu0 0.0
  %192 = vmatpush1.msra.mxu0 0.0
  %193 = vmatprep.subr.mxu0 0.0
  %194 = vmatpush1.msra.mxu0 0.0
  %195 = vmatprep.subr.mxu0 0.0
  %196 = vmatpush1.msra.mxu0 0.0
  %197 = vmatprep.subr.mxu0 0.0
  %198 = vmatpush1.msra.mxu0 0.0
  %199 = vmatprep.subr.mxu0 0.0
  %200 = vmatpush1.msra.mxu0 0.0
  %201 = vmatprep.subr.mxu0 0.0
  %202 = vmatpush1.msra.mxu0 0.0
  %203 = vmatprep.subr.mxu0 0.0
  %204 = vmatpush1.msra.mxu0 0.0
  %205 = vmatprep.subr.mxu0 0.0
  %206 = vmatpush1.msra.mxu0 0.0
  %207 = vmatprep.mubr.f32.mxu0 0.0
  %208 = vmatmul.mubr.f32.gmra.mrb[0].mxu0 %v138
  %v209 = vpop.f32.mrb[0].mxu0
  %v210 = vadd.f32 %v135, %v209
  %v211 = vpop.f32.mrb[0].mxu0
  %212 = vdwg.mxu0
  %v213 = vmax.f32 %v210, 0.0
  %214 = vst.msk [vmem:[#allocation2 + $0x8] sm:$0xff] %vm122, %v213
  %v215 = vld [vmem:[%s4] sm:$0x1]
  %v217 = vlaneseq
  %v218 = vshrl.u32 %v217, 7
  %v219 = vsub.s32 0, %v218
  %v220 = vrot.slane %v215, %v219
  %vm222 = vcmask 517120
  %223 = vst.msk [vmem:[#allocation3] sm:$0x3] %vm222, %v220
  %v224 = vld [vmem:[#allocation2] sm:$0x1]
  %v225 = vld [vmem:[#allocation2 + $0x8] sm:$0x1]
  %v227 = vrot.slane %v225, 7
  %vm229 = vcmask 1040384
  %v230 = vsel %vm229, %v224, %v227
  %v231 = vld [vmem:[#allocation3] sm:$0x3]
  %v232 = vld [vmem:[%s3] sm:$0xff]
  %v233 = vld [vmem:[%s3 + $0x8] sm:$0xff]
  %v234 = vld [vmem:[%s3 + $0x10] sm:$0xff]
  %v235 = vld [vmem:[%s3 + $0x18] sm:$0xff]
  %v236 = vld [vmem:[%s3 + $0x20] sm:$0xff]
  %v237 = vld [vmem:[%s3 + $0x28] sm:$0xff]
  %v238 = vld [vmem:[%s3 + $0x30] sm:$0xff]
  %v239 = vld [vmem:[%s3 + $0x38] sm:$0xff]
  %v241 = vsel %vm122, %v230, 0
  %243 = vmatprep.subr.mxu0 0.0
  %244 = vmatpush1.msra.mxu0 %v232
  %245 = vmatprep.subr.mxu0 0.0
  %246 = vmatpush1.msra.mxu0 %v233
  %247 = vmatprep.subr.mxu0 0.0
  %248 = vmatpush1.msra.mxu0 %v234
  %249 = vmatprep.subr.mxu0 0.0
  %250 = vmatpush1.msra.mxu0 %v235
  %251 = vmatprep.subr.mxu0 0.0
  %252 = vmatpush1.msra.mxu0 %v236
  %253 = vmatprep.subr.mxu0 0.0
  %254 = vmatpush1.msra.mxu0 %v237
  %255 = vmatprep.subr.mxu0 0.0
  %256 = vmatpush1.msra.mxu0 %v238
  %257 = vmatprep.subr.mxu0 0.0
  %258 = vmatpush1.msra.mxu0 %v239
  %259 = vmatprep.subr.mxu0 0.0
  %260 = vmatpush1.msra.mxu0 0.0
  %261 = vmatprep.subr.mxu0 0.0
  %262 = vmatpush1.msra.mxu0 0.0
  %263 = vmatprep.subr.mxu0 0.0
  %264 = vmatpush1.msra.mxu0 0.0
  %265 = vmatprep.subr.mxu0 0.0
  %266 = vmatpush1.msra.mxu0 0.0
  %267 = vmatprep.subr.mxu0 0.0
  %268 = vmatpush1.msra.mxu0 0.0
  %269 = vmatprep.subr.mxu0 0.0
  %270 = vmatpush1.msra.mxu0 0.0
  %271 = vmatprep.subr.mxu0 0.0
  %272 = vmatpush1.msra.mxu0 0.0
  %273 = vmatprep.subr.mxu0 0.0
  %274 = vmatpush1.msra.mxu0 0.0
  %275 = vmatprep.subr.mxu0 0.0
  %276 = vmatpush1.msra.mxu0 0.0
  %277 = vmatprep.subr.mxu0 0.0
  %278 = vmatpush1.msra.mxu0 0.0
  %279 = vmatprep.subr.mxu0 0.0
  %280 = vmatpush1.msra.mxu0 0.0
  %281 = vmatprep.subr.mxu0 0.0
  %282 = vmatpush1.msra.mxu0 0.0
  %283 = vmatprep.subr.mxu0 0.0
  %284 = vmatpush1.msra.mxu0 0.0
  %285 = vmatprep.subr.mxu0 0.0
  %286 = vmatpush1.msra.mxu0 0.0
  %287 = vmatprep.subr.mxu0 0.0
  %288 = vmatpush1.msra.mxu0 0.0
  %289 = vmatprep.subr.mxu0 0.0
  %290 = vmatpush1.msra.mxu0 0.0
  %291 = vmatprep.subr.mxu0 0.0
  %292 = vmatpush1.msra.mxu0 0.0
  %293 = vmatprep.subr.mxu0 0.0
  %294 = vmatpush1.msra.mxu0 0.0
  %295 = vmatprep.subr.mxu0 0.0
  %296 = vmatpush1.msra.mxu0 0.0
  %297 = vmatprep.subr.mxu0 0.0
  %298 = vmatpush1.msra.mxu0 0.0
  %299 = vmatprep.subr.mxu0 0.0
  %300 = vmatpush1.msra.mxu0 0.0
  %301 = vmatprep.subr.mxu0 0.0
  %302 = vmatpush1.msra.mxu0 0.0
  %303 = vmatprep.subr.mxu0 0.0
  %304 = vmatpush1.msra.mxu0 0.0
  %305 = vmatprep.subr.mxu0 0.0
  %306 = vmatpush1.msra.mxu0 0.0
  %307 = vmatprep.mubr.f32.mxu0 0.0
  %308 = vmatmul.mubr.f32.gmra.mrb[0].mxu0 %v241
  %v309 = vpop.f32.mrb[0].mxu0
  %v310 = vadd.f32 0.0, %v309
  %v311 = vpop.f32.mrb[0].mxu0
  %312 = vdwg.mxu0
  %v313 = vadd.f32 %v231, %v310
  %314 = vst.msk [vmem:[#allocation3] sm:$0x3] %vm222, %v313
  %v315 = vld [vmem:[#allocation2 + $0x1] sm:$0x1]
  %v316 = vld [vmem:[#allocation2 + $0x9] sm:$0x1]
  %v318 = vrot.slane %v316, 7
  %v320 = vsel %vm229, %v315, %v318
  %v321 = vld [vmem:[#allocation3] sm:$0x3]
  %s322 = scalar_lea.vmem %s3, 64
  %v323 = vld [vmem:[%s322] sm:$0xff]
  %v324 = vld [vmem:[%s322 + $0x8] sm:$0xff]
  %v325 = vld [vmem:[%s322 + $0x10] sm:$0xff]
  %v326 = vld [vmem:[%s322 + $0x18] sm:$0xff]
  %v327 = vld [vmem:[%s322 + $0x20] sm:$0xff]
  %v328 = vld [vmem:[%s322 + $0x28] sm:$0xff]
  %v329 = vld [vmem:[%s322 + $0x30] sm:$0xff]
  %v330 = vld [vmem:[%s322 + $0x38] sm:$0xff]
  %v332 = vsel %vm122, %v320, 0
  %334 = vmatprep.subr.mxu0 0.0
  %335 = vmatpush1.msra.mxu0 %v323
  %336 = vmatprep.subr.mxu0 0.0
  %337 = vmatpush1.msra.mxu0 %v324
  %338 = vmatprep.subr.mxu0 0.0
  %339 = vmatpush1.msra.mxu0 %v325
  %340 = vmatprep.subr.mxu0 0.0
  %341 = vmatpush1.msra.mxu0 %v326
  %342 = vmatprep.subr.mxu0 0.0
  %343 = vmatpush1.msra.mxu0 %v327
  %344 = vmatprep.subr.mxu0 0.0
  %345 = vmatpush1.msra.mxu0 %v328
  %346 = vmatprep.subr.mxu0 0.0
  %347 = vmatpush1.msra.mxu0 %v329
  %348 = vmatprep.subr.mxu0 0.0
  %349 = vmatpush1.msra.mxu0 %v330
  %350 = vmatprep.subr.mxu0 0.0
  %351 = vmatpush1.msra.mxu0 0.0
  %352 = vmatprep.subr.mxu0 0.0
  %353 = vmatpush1.msra.mxu0 0.0
  %354 = vmatprep.subr.mxu0 0.0
  %355 = vmatpush1.msra.mxu0 0.0
  %356 = vmatprep.subr.mxu0 0.0
  %357 = vmatpush1.msra.mxu0 0.0
  %358 = vmatprep.subr.mxu0 0.0
  %359 = vmatpush1.msra.mxu0 0.0
  %360 = vmatprep.subr.mxu0 0.0
  %361 = vmatpush1.msra.mxu0 0.0
  %362 = vmatprep.subr.mxu0 0.0
  %363 = vmatpush1.msra.mxu0 0.0
  %364 = vmatprep.subr.mxu0 0.0
  %365 = vmatpush1.msra.mxu0 0.0
  %366 = vmatprep.subr.mxu0 0.0
  %367 = vmatpush1.msra.mxu0 0.0
  %368 = vmatprep.subr.mxu0 0.0
  %369 = vmatpush1.msra.mxu0 0.0
  %370 = vmatprep.subr.mxu0 0.0
  %371 = vmatpush1.msra.mxu0 0.0
  %372 = vmatprep.subr.mxu0 0.0
  %373 = vmatpush1.msra.mxu0 0.0
  %374 = vmatprep.subr.mxu0 0.0
  %375 = vmatpush1.msra.mxu0 0.0
  %376 = vmatprep.subr.mxu0 0.0
  %377 = vmatpush1.msra.mxu0 0.0
  %378 = vmatprep.subr.mxu0 0.0
  %379 = vmatpush1.msra.mxu0 0.0
  %380 = vmatprep.subr.mxu0 0.0
  %381 = vmatpush1.msra.mxu0 0.0
  %382 = vmatprep.subr.mxu0 0.0
  %383 = vmatpush1.msra.mxu0 0.0
  %384 = vmatprep.subr.mxu0 0.0
  %385 = vmatpush1.msra.mxu0 0.0
  %386 = vmatprep.subr.mxu0 0.0
  %387 = vmatpush1.msra.mxu0 0.0
  %388 = vmatprep.subr.mxu0 0.0
  %389 = vmatpush1.msra.mxu0 0.0
  %390 = vmatprep.subr.mxu0 0.0
  %391 = vmatpush1.msra.mxu0 0.0
  %392 = vmatprep.subr.mxu0 0.0
  %393 = vmatpush1.msra.mxu0 0.0
  %394 = vmatprep.subr.mxu0 0.0
  %395 = vmatpush1.msra.mxu0 0.0
  %396 = vmatprep.subr.mxu0 0.0
  %397 = vmatpush1.msra.mxu0 0.0
  %398 = vmatprep.mubr.f32.mxu0 0.0
  %399 = vmatmul.mubr.f32.gmra.mrb[0].mxu0 %v332
  %v400 = vpop.f32.mrb[0].mxu0
  %v401 = vadd.f32 0.0, %v400
  %v402 = vpop.f32.mrb[0].mxu0
  %403 = vdwg.mxu0
  %v404 = vadd.f32 %v321, %v401
  %405 = vst.msk [vmem:[#allocation3] sm:$0x3] %vm222, %v404
  %v406 = vld [vmem:[#allocation2 + $0x2] sm:$0x1]
  %v407 = vld [vmem:[#allocation2 + $0xa] sm:$0x1]
  %v409 = vrot.slane %v407, 7
  %v411 = vsel %vm229, %v406, %v409
  %v412 = vld [vmem:[#allocation3] sm:$0x3]
  %s413 = scalar_lea.vmem %s3, 128
  %v414 = vld [vmem:[%s413] sm:$0xff]
  %v415 = vld [vmem:[%s413 + $0x8] sm:$0xff]
  %v416 = vld [vmem:[%s413 + $0x10] sm:$0xff]
  %v417 = vld [vmem:[%s413 + $0x18] sm:$0xff]
  %v418 = vld [vmem:[%s413 + $0x20] sm:$0xff]
  %v419 = vld [vmem:[%s413 + $0x28] sm:$0xff]
  %v420 = vld [vmem:[%s413 + $0x30] sm:$0xff]
  %v421 = vld [vmem:[%s413 + $0x38] sm:$0xff]
  %v423 = vsel %vm122, %v411, 0
  %425 = vmatprep.subr.mxu0 0.0
  %426 = vmatpush1.msra.mxu0 %v414
  %427 = vmatprep.subr.mxu0 0.0
  %428 = vmatpush1.msra.mxu0 %v415
  %429 = vmatprep.subr.mxu0 0.0
  %430 = vmatpush1.msra.mxu0 %v416
  %431 = vmatprep.subr.mxu0 0.0
  %432 = vmatpush1.msra.mxu0 %v417
  %433 = vmatprep.subr.mxu0 0.0
  %434 = vmatpush1.msra.mxu0 %v418
  %435 = vmatprep.subr.mxu0 0.0
  %436 = vmatpush1.msra.mxu0 %v419
  %437 = vmatprep.subr.mxu0 0.0
  %438 = vmatpush1.msra.mxu0 %v420
  %439 = vmatprep.subr.mxu0 0.0
  %440 = vmatpush1.msra.mxu0 %v421
  %441 = vmatprep.subr.mxu0 0.0
  %442 = vmatpush1.msra.mxu0 0.0
  %443 = vmatprep.subr.mxu0 0.0
  %444 = vmatpush1.msra.mxu0 0.0
  %445 = vmatprep.subr.mxu0 0.0
  %446 = vmatpush1.msra.mxu0 0.0
  %447 = vmatprep.subr.mxu0 0.0
  %448 = vmatpush1.msra.mxu0 0.0
  %449 = vmatprep.subr.mxu0 0.0
  %450 = vmatpush1.msra.mxu0 0.0
  %451 = vmatprep.subr.mxu0 0.0
  %452 = vmatpush1.msra.mxu0 0.0
  %453 = vmatprep.subr.mxu0 0.0
  %454 = vmatpush1.msra.mxu0 0.0
  %455 = vmatprep.subr.mxu0 0.0
  %456 = vmatpush1.msra.mxu0 0.0
  %457 = vmatprep.subr.mxu0 0.0
  %458 = vmatpush1.msra.mxu0 0.0
  %459 = vmatprep.subr.mxu0 0.0
  %460 = vmatpush1.msra.mxu0 0.0
  %461 = vmatprep.subr.mxu0 0.0
  %462 = vmatpush1.msra.mxu0 0.0
  %463 = vmatprep.subr.mxu0 0.0
  %464 = vmatpush1.msra.mxu0 0.0
  %465 = vmatprep.subr.mxu0 0.0
  %466 = vmatpush1.msra.mxu0 0.0
  %467 = vmatprep.subr.mxu0 0.0
  %468 = vmatpush1.msra.mxu0 0.0
  %469 = vmatprep.subr.mxu0 0.0
  %470 = vmatpush1.msra.mxu0 0.0
  %471 = vmatprep.subr.mxu0 0.0
  %472 = vmatpush1.msra.mxu0 0.0
  %473 = vmatprep.subr.mxu0 0.0
  %474 = vmatpush1.msra.mxu0 0.0
  %475 = vmatprep.subr.mxu0 0.0
  %476 = vmatpush1.msra.mxu0 0.0
  %477 = vmatprep.subr.mxu0 0.0
  %478 = vmatpush1.msra.mxu0 0.0
  %479 = vmatprep.subr.mxu0 0.0
  %480 = vmatpush1.msra.mxu0 0.0
  %481 = vmatprep.subr.mxu0 0.0
  %482 = vmatpush1.msra.mxu0 0.0
  %483 = vmatprep.subr.mxu0 0.0
  %484 = vmatpush1.msra.mxu0 0.0
  %485 = vmatprep.subr.mxu0 0.0
  %486 = vmatpush1.msra.mxu0 0.0
  %487 = vmatprep.subr.mxu0 0.0
  %488 = vmatpush1.msra.mxu0 0.0
  %489 = vmatprep.mubr.f32.mxu0 0.0
  %490 = vmatmul.mubr.f32.gmra.mrb[0].mxu0 %v423
  %v491 = vpop.f32.mrb[0].mxu0
  %v492 = vadd.f32 0.0, %v491
  %v493 = vpop.f32.mrb[0].mxu0
  %494 = vdwg.mxu0
  %v495 = vadd.f32 %v412, %v492
  %496 = vst.msk [vmem:[#allocation3] sm:$0x3] %vm222, %v495
  %v497 = vld [vmem:[#allocation2 + $0x3] sm:$0x1]
  %v498 = vld [vmem:[#allocation2 + $0xb] sm:$0x1]
  %v500 = vrot.slane %v498, 7
  %v502 = vsel %vm229, %v497, %v500
  %v503 = vld [vmem:[#allocation3] sm:$0x3]
  %s504 = scalar_lea.vmem %s3, 192
  %v505 = vld [vmem:[%s504] sm:$0xff]
  %v506 = vld [vmem:[%s504 + $0x8] sm:$0xff]
  %v507 = vld [vmem:[%s504 + $0x10] sm:$0xff]
  %v508 = vld [vmem:[%s504 + $0x18] sm:$0xff]
  %v509 = vld [vmem:[%s504 + $0x20] sm:$0xff]
  %v510 = vld [vmem:[%s504 + $0x28] sm:$0xff]
  %v511 = vld [vmem:[%s504 + $0x30] sm:$0xff]
  %v512 = vld [vmem:[%s504 + $0x38] sm:$0xff]
  %v514 = vsel %vm122, %v502, 0
  %516 = vmatprep.subr.mxu0 0.0
  %517 = vmatpush1.msra.mxu0 %v505
  %518 = vmatprep.subr.mxu0 0.0
  %519 = vmatpush1.msra.mxu0 %v506
  %520 = vmatprep.subr.mxu0 0.0
  %521 = vmatpush1.msra.mxu0 %v507
  %522 = vmatprep.subr.mxu0 0.0
  %523 = vmatpush1.msra.mxu0 %v508
  %524 = vmatprep.subr.mxu0 0.0
  %525 = vmatpush1.msra.mxu0 %v509
  %526 = vmatprep.subr.mxu0 0.0
  %527 = vmatpush1.msra.mxu0 %v510
  %528 = vmatprep.subr.mxu0 0.0
  %529 = vmatpush1.msra.mxu0 %v511
  %530 = vmatprep.subr.mxu0 0.0
  %531 = vmatpush1.msra.mxu0 %v512
  %532 = vmatprep.subr.mxu0 0.0
  %533 = vmatpush1.msra.mxu0 0.0
  %534 = vmatprep.subr.mxu0 0.0
  %535 = vmatpush1.msra.mxu0 0.0
  %536 = vmatprep.subr.mxu0 0.0
  %537 = vmatpush1.msra.mxu0 0.0
  %538 = vmatprep.subr.mxu0 0.0
  %539 = vmatpush1.msra.mxu0 0.0
  %540 = vmatprep.subr.mxu0 0.0
  %541 = vmatpush1.msra.mxu0 0.0
  %542 = vmatprep.subr.mxu0 0.0
  %543 = vmatpush1.msra.mxu0 0.0
  %544 = vmatprep.subr.mxu0 0.0
  %545 = vmatpush1.msra.mxu0 0.0
  %546 = vmatprep.subr.mxu0 0.0
  %547 = vmatpush1.msra.mxu0 0.0
  %548 = vmatprep.subr.mxu0 0.0
  %549 = vmatpush1.msra.mxu0 0.0
  %550 = vmatprep.subr.mxu0 0.0
  %551 = vmatpush1.msra.mxu0 0.0
  %552 = vmatprep.subr.mxu0 0.0
  %553 = vmatpush1.msra.mxu0 0.0
  %554 = vmatprep.subr.mxu0 0.0
  %555 = vmatpush1.msra.mxu0 0.0
  %556 = vmatprep.subr.mxu0 0.0
  %557 = vmatpush1.msra.mxu0 0.0
  %558 = vmatprep.subr.mxu0 0.0
  %559 = vmatpush1.msra.mxu0 0.0
  %560 = vmatprep.subr.mxu0 0.0
  %561 = vmatpush1.msra.mxu0 0.0
  %562 = vmatprep.subr.mxu0 0.0
  %563 = vmatpush1.msra.mxu0 0.0
  %564 = vmatprep.subr.mxu0 0.0
  %565 = vmatpush1.msra.mxu0 0.0
  %566 = vmatprep.subr.mxu0 0.0
  %567 = vmatpush1.msra.mxu0 0.0
  %568 = vmatprep.subr.mxu0 0.0
  %569 = vmatpush1.msra.mxu0 0.0
  %570 = vmatprep.subr.mxu0 0.0
  %571 = vmatpush1.msra.mxu0 0.0
  %572 = vmatprep.subr.mxu0 0.0
  %573 = vmatpush1.msra.mxu0 0.0
  %574 = vmatprep.subr.mxu0 0.0
  %575 = vmatpush1.msra.mxu0 0.0
  %576 = vmatprep.subr.mxu0 0.0
  %577 = vmatpush1.msra.mxu0 0.0
  %578 = vmatprep.subr.mxu0 0.0
  %579 = vmatpush1.msra.mxu0 0.0
  %580 = vmatprep.mubr.f32.mxu0 0.0
  %581 = vmatmul.mubr.f32.gmra.mrb[0].mxu0 %v514
  %v582 = vpop.f32.mrb[0].mxu0
  %v583 = vadd.f32 0.0, %v582
  %v584 = vpop.f32.mrb[0].mxu0
  %585 = vdwg.mxu0
  %v586 = vadd.f32 %v503, %v583
  %587 = vst.msk [vmem:[#allocation3] sm:$0x3] %vm222, %v586
  %v588 = vld [vmem:[#allocation2 + $0x4] sm:$0x1]
  %v589 = vld [vmem:[#allocation2 + $0xc] sm:$0x1]
  %v591 = vrot.slane %v589, 7
  %v593 = vsel %vm229, %v588, %v591
  %v594 = vld [vmem:[#allocation3] sm:$0x3]
  %s595 = scalar_lea.vmem %s3, 256
  %v596 = vld [vmem:[%s595] sm:$0xff]
  %v597 = vld [vmem:[%s595 + $0x8] sm:$0xff]
  %v598 = vld [vmem:[%s595 + $0x10] sm:$0xff]
  %v599 = vld [vmem:[%s595 + $0x18] sm:$0xff]
  %v600 = vld [vmem:[%s595 + $0x20] sm:$0xff]
  %v601 = vld [vmem:[%s595 + $0x28] sm:$0xff]
  %v602 = vld [vmem:[%s595 + $0x30] sm:$0xff]
  %v603 = vld [vmem:[%s595 + $0x38] sm:$0xff]
  %v605 = vsel %vm122, %v593, 0
  %607 = vmatprep.subr.mxu0 0.0
  %608 = vmatpush1.msra.mxu0 %v596
  %609 = vmatprep.subr.mxu0 0.0
  %610 = vmatpush1.msra.mxu0 %v597
  %611 = vmatprep.subr.mxu0 0.0
  %612 = vmatpush1.msra.mxu0 %v598
  %613 = vmatprep.subr.mxu0 0.0
  %614 = vmatpush1.msra.mxu0 %v599
  %615 = vmatprep.subr.mxu0 0.0
  %616 = vmatpush1.msra.mxu0 %v600
  %617 = vmatprep.subr.mxu0 0.0
  %618 = vmatpush1.msra.mxu0 %v601
  %619 = vmatprep.subr.mxu0 0.0
  %620 = vmatpush1.msra.mxu0 %v602
  %621 = vmatprep.subr.mxu0 0.0
  %622 = vmatpush1.msra.mxu0 %v603
  %623 = vmatprep.subr.mxu0 0.0
  %624 = vmatpush1.msra.mxu0 0.0
  %625 = vmatprep.subr.mxu0 0.0
  %626 = vmatpush1.msra.mxu0 0.0
  %627 = vmatprep.subr.mxu0 0.0
  %628 = vmatpush1.msra.mxu0 0.0
  %629 = vmatprep.subr.mxu0 0.0
  %630 = vmatpush1.msra.mxu0 0.0
  %631 = vmatprep.subr.mxu0 0.0
  %632 = vmatpush1.msra.mxu0 0.0
  %633 = vmatprep.subr.mxu0 0.0
  %634 = vmatpush1.msra.mxu0 0.0
  %635 = vmatprep.subr.mxu0 0.0
  %636 = vmatpush1.msra.mxu0 0.0
  %637 = vmatprep.subr.mxu0 0.0
  %638 = vmatpush1.msra.mxu0 0.0
  %639 = vmatprep.subr.mxu0 0.0
  %640 = vmatpush1.msra.mxu0 0.0
  %641 = vmatprep.subr.mxu0 0.0
  %642 = vmatpush1.msra.mxu0 0.0
  %643 = vmatprep.subr.mxu0 0.0
  %644 = vmatpush1.msra.mxu0 0.0
  %645 = vmatprep.subr.mxu0 0.0
  %646 = vmatpush1.msra.mxu0 0.0
  %647 = vmatprep.subr.mxu0 0.0
  %648 = vmatpush1.msra.mxu0 0.0
  %649 = vmatprep.subr.mxu0 0.0
  %650 = vmatpush1.msra.mxu0 0.0
  %651 = vmatprep.subr.mxu0 0.0
  %652 = vmatpush1.msra.mxu0 0.0
  %653 = vmatprep.subr.mxu0 0.0
  %654 = vmatpush1.msra.mxu0 0.0
  %655 = vmatprep.subr.mxu0 0.0
  %656 = vmatpush1.msra.mxu0 0.0
  %657 = vmatprep.subr.mxu0 0.0
  %658 = vmatpush1.msra.mxu0 0.0
  %659 = vmatprep.subr.mxu0 0.0
  %660 = vmatpush1.msra.mxu0 0.0
  %661 = vmatprep.subr.mxu0 0.0
  %662 = vmatpush1.msra.mxu0 0.0
  %663 = vmatprep.subr.mxu0 0.0
  %664 = vmatpush1.msra.mxu0 0.0
  %665 = vmatprep.subr.mxu0 0.0
  %666 = vmatpush1.msra.mxu0 0.0
  %667 = vmatprep.subr.mxu0 0.0
  %668 = vmatpush1.msra.mxu0 0.0
  %669 = vmatprep.subr.mxu0 0.0
  %670 = vmatpush1.msra.mxu0 0.0
  %671 = vmatprep.mubr.f32.mxu0 0.0
  %672 = vmatmul.mubr.f32.gmra.mrb[0].mxu0 %v605
  %v673 = vpop.f32.mrb[0].mxu0
  %v674 = vadd.f32 0.0, %v673
  %v675 = vpop.f32.mrb[0].mxu0
  %676 = vdwg.mxu0
  %v677 = vadd.f32 %v594, %v674
  %678 = vst.msk [vmem:[#allocation3] sm:$0x3] %vm222, %v677
  %v679 = vld [vmem:[#allocation2 + $0x5] sm:$0x1]
  %v680 = vld [vmem:[#allocation2 + $0xd] sm:$0x1]
  %v682 = vrot.slane %v680, 7
  %v684 = vsel %vm229, %v679, %v682
  %v685 = vld [vmem:[#allocation3] sm:$0x3]
  %s686 = scalar_lea.vmem %s3, 320
  %v687 = vld [vmem:[%s686] sm:$0xff]
  %v688 = vld [vmem:[%s686 + $0x8] sm:$0xff]
  %v689 = vld [vmem:[%s686 + $0x10] sm:$0xff]
  %v690 = vld [vmem:[%s686 + $0x18] sm:$0xff]
  %v691 = vld [vmem:[%s686 + $0x20] sm:$0xff]
  %v692 = vld [vmem:[%s686 + $0x28] sm:$0xff]
  %v693 = vld [vmem:[%s686 + $0x30] sm:$0xff]
  %v694 = vld [vmem:[%s686 + $0x38] sm:$0xff]
  %v696 = vsel %vm122, %v684, 0
  %698 = vmatprep.subr.mxu0 0.0
  %699 = vmatpush1.msra.mxu0 %v687
  %700 = vmatprep.subr.mxu0 0.0
  %701 = vmatpush1.msra.mxu0 %v688
  %702 = vmatprep.subr.mxu0 0.0
  %703 = vmatpush1.msra.mxu0 %v689
  %704 = vmatprep.subr.mxu0 0.0
  %705 = vmatpush1.msra.mxu0 %v690
  %706 = vmatprep.subr.mxu0 0.0
  %707 = vmatpush1.msra.mxu0 %v691
  %708 = vmatprep.subr.mxu0 0.0
  %709 = vmatpush1.msra.mxu0 %v692
  %710 = vmatprep.subr.mxu0 0.0
  %711 = vmatpush1.msra.mxu0 %v693
  %712 = vmatprep.subr.mxu0 0.0
  %713 = vmatpush1.msra.mxu0 %v694
  %714 = vmatprep.subr.mxu0 0.0
  %715 = vmatpush1.msra.mxu0 0.0
  %716 = vmatprep.subr.mxu0 0.0
  %717 = vmatpush1.msra.mxu0 0.0
  %718 = vmatprep.subr.mxu0 0.0
  %719 = vmatpush1.msra.mxu0 0.0
  %720 = vmatprep.subr.mxu0 0.0
  %721 = vmatpush1.msra.mxu0 0.0
  %722 = vmatprep.subr.mxu0 0.0
  %723 = vmatpush1.msra.mxu0 0.0
  %724 = vmatprep.subr.mxu0 0.0
  %725 = vmatpush1.msra.mxu0 0.0
  %726 = vmatprep.subr.mxu0 0.0
  %727 = vmatpush1.msra.mxu0 0.0
  %728 = vmatprep.subr.mxu0 0.0
  %729 = vmatpush1.msra.mxu0 0.0
  %730 = vmatprep.subr.mxu0 0.0
  %731 = vmatpush1.msra.mxu0 0.0
  %732 = vmatprep.subr.mxu0 0.0
  %733 = vmatpush1.msra.mxu0 0.0
  %734 = vmatprep.subr.mxu0 0.0
  %735 = vmatpush1.msra.mxu0 0.0
  %736 = vmatprep.subr.mxu0 0.0
  %737 = vmatpush1.msra.mxu0 0.0
  %738 = vmatprep.subr.mxu0 0.0
  %739 = vmatpush1.msra.mxu0 0.0
  %740 = vmatprep.subr.mxu0 0.0
  %741 = vmatpush1.msra.mxu0 0.0
  %742 = vmatprep.subr.mxu0 0.0
  %743 = vmatpush1.msra.mxu0 0.0
  %744 = vmatprep.subr.mxu0 0.0
  %745 = vmatpush1.msra.mxu0 0.0
  %746 = vmatprep.subr.mxu0 0.0
  %747 = vmatpush1.msra.mxu0 0.0
  %748 = vmatprep.subr.mxu0 0.0
  %749 = vmatpush1.msra.mxu0 0.0
  %750 = vmatprep.subr.mxu0 0.0
  %751 = vmatpush1.msra.mxu0 0.0
  %752 = vmatprep.subr.mxu0 0.0
  %753 = vmatpush1.msra.mxu0 0.0
  %754 = vmatprep.subr.mxu0 0.0
  %755 = vmatpush1.msra.mxu0 0.0
  %756 = vmatprep.subr.mxu0 0.0
  %757 = vmatpush1.msra.mxu0 0.0
  %758 = vmatprep.subr.mxu0 0.0
  %759 = vmatpush1.msra.mxu0 0.0
  %760 = vmatprep.subr.mxu0 0.0
  %761 = vmatpush1.msra.mxu0 0.0
  %762 = vmatprep.mubr.f32.mxu0 0.0
  %763 = vmatmul.mubr.f32.gmra.mrb[0].mxu0 %v696
  %v764 = vpop.f32.mrb[0].mxu0
  %v765 = vadd.f32 0.0, %v764
  %v766 = vpop.f32.mrb[0].mxu0
  %767 = vdwg.mxu0
  %v768 = vadd.f32 %v685, %v765
  %769 = vst.msk [vmem:[#allocation3] sm:$0x3] %vm222, %v768
  %v770 = vld [vmem:[#allocation2 + $0x6] sm:$0x1]
  %v771 = vld [vmem:[#allocation2 + $0xe] sm:$0x1]
  %v773 = vrot.slane %v771, 7
  %v775 = vsel %vm229, %v770, %v773
  %v776 = vld [vmem:[#allocation3] sm:$0x3]
  %s777 = scalar_lea.vmem %s3, 384
  %v778 = vld [vmem:[%s777] sm:$0xff]
  %v779 = vld [vmem:[%s777 + $0x8] sm:$0xff]
  %v780 = vld [vmem:[%s777 + $0x10] sm:$0xff]
  %v781 = vld [vmem:[%s777 + $0x18] sm:$0xff]
  %v782 = vld [vmem:[%s777 + $0x20] sm:$0xff]
  %v783 = vld [vmem:[%s777 + $0x28] sm:$0xff]
  %v784 = vld [vmem:[%s777 + $0x30] sm:$0xff]
  %v785 = vld [vmem:[%s777 + $0x38] sm:$0xff]
  %v787 = vsel %vm122, %v775, 0
  %789 = vmatprep.subr.mxu0 0.0
  %790 = vmatpush1.msra.mxu0 %v778
  %791 = vmatprep.subr.mxu0 0.0
  %792 = vmatpush1.msra.mxu0 %v779
  %793 = vmatprep.subr.mxu0 0.0
  %794 = vmatpush1.msra.mxu0 %v780
  %795 = vmatprep.subr.mxu0 0.0
  %796 = vmatpush1.msra.mxu0 %v781
  %797 = vmatprep.subr.mxu0 0.0
  %798 = vmatpush1.msra.mxu0 %v782
  %799 = vmatprep.subr.mxu0 0.0
  %800 = vmatpush1.msra.mxu0 %v783
  %801 = vmatprep.subr.mxu0 0.0
  %802 = vmatpush1.msra.mxu0 %v784
  %803 = vmatprep.subr.mxu0 0.0
  %804 = vmatpush1.msra.mxu0 %v785
  %805 = vmatprep.subr.mxu0 0.0
  %806 = vmatpush1.msra.mxu0 0.0
  %807 = vmatprep.subr.mxu0 0.0
  %808 = vmatpush1.msra.mxu0 0.0
  %809 = vmatprep.subr.mxu0 0.0
  %810 = vmatpush1.msra.mxu0 0.0
  %811 = vmatprep.subr.mxu0 0.0
  %812 = vmatpush1.msra.mxu0 0.0
  %813 = vmatprep.subr.mxu0 0.0
  %814 = vmatpush1.msra.mxu0 0.0
  %815 = vmatprep.subr.mxu0 0.0
  %816 = vmatpush1.msra.mxu0 0.0
  %817 = vmatprep.subr.mxu0 0.0
  %818 = vmatpush1.msra.mxu0 0.0
  %819 = vmatprep.subr.mxu0 0.0
  %820 = vmatpush1.msra.mxu0 0.0
  %821 = vmatprep.subr.mxu0 0.0
  %822 = vmatpush1.msra.mxu0 0.0
  %823 = vmatprep.subr.mxu0 0.0
  %824 = vmatpush1.msra.mxu0 0.0
  %825 = vmatprep.subr.mxu0 0.0
  %826 = vmatpush1.msra.mxu0 0.0
  %827 = vmatprep.subr.mxu0 0.0
  %828 = vmatpush1.msra.mxu0 0.0
  %829 = vmatprep.subr.mxu0 0.0
  %830 = vmatpush1.msra.mxu0 0.0
  %831 = vmatprep.subr.mxu0 0.0
  %832 = vmatpush1.msra.mxu0 0.0
  %833 = vmatprep.subr.mxu0 0.0
  %834 = vmatpush1.msra.mxu0 0.0
  %835 = vmatprep.subr.mxu0 0.0
  %836 = vmatpush1.msra.mxu0 0.0
  %837 = vmatprep.subr.mxu0 0.0
  %838 = vmatpush1.msra.mxu0 0.0
  %839 = vmatprep.subr.mxu0 0.0
  %840 = vmatpush1.msra.mxu0 0.0
  %841 = vmatprep.subr.mxu0 0.0
  %842 = vmatpush1.msra.mxu0 0.0
  %843 = vmatprep.subr.mxu0 0.0
  %844 = vmatpush1.msra.mxu0 0.0
  %845 = vmatprep.subr.mxu0 0.0
  %846 = vmatpush1.msra.mxu0 0.0
  %847 = vmatprep.subr.mxu0 0.0
  %848 = vmatpush1.msra.mxu0 0.0
  %849 = vmatprep.subr.mxu0 0.0
  %850 = vmatpush1.msra.mxu0 0.0
  %851 = vmatprep.subr.mxu0 0.0
  %852 = vmatpush1.msra.mxu0 0.0
  %853 = vmatprep.mubr.f32.mxu0 0.0
  %854 = vmatmul.mubr.f32.gmra.mrb[0].mxu0 %v787
  %v855 = vpop.f32.mrb[0].mxu0
  %v856 = vadd.f32 0.0, %v855
  %v857 = vpop.f32.mrb[0].mxu0
  %858 = vdwg.mxu0
  %v859 = vadd.f32 %v776, %v856
  %860 = vst.msk [vmem:[#allocation3] sm:$0x3] %vm222, %v859
  %v861 = vld [vmem:[#allocation2 + $0x7] sm:$0x1]
  %v862 = vld [vmem:[#allocation2 + $0xf] sm:$0x1]
  %v864 = vrot.slane %v862, 7
  %v866 = vsel %vm229, %v861, %v864
  %v867 = vld [vmem:[#allocation3] sm:$0x3]
  %s868 = scalar_lea.vmem %s3, 448
  %v869 = vld [vmem:[%s868] sm:$0xff]
  %v870 = vld [vmem:[%s868 + $0x8] sm:$0xff]
  %v871 = vld [vmem:[%s868 + $0x10] sm:$0xff]
  %v872 = vld [vmem:[%s868 + $0x18] sm:$0xff]
  %v873 = vld [vmem:[%s868 + $0x20] sm:$0xff]
  %v874 = vld [vmem:[%s868 + $0x28] sm:$0xff]
  %v875 = vld [vmem:[%s868 + $0x30] sm:$0xff]
  %v876 = vld [vmem:[%s868 + $0x38] sm:$0xff]
  %v878 = vsel %vm122, %v866, 0
  %880 = vmatprep.subr.mxu0 0.0
  %881 = vmatpush1.msra.mxu0 %v869
  %882 = vmatprep.subr.mxu0 0.0
  %883 = vmatpush1.msra.mxu0 %v870
  %884 = vmatprep.subr.mxu0 0.0
  %885 = vmatpush1.msra.mxu0 %v871
  %886 = vmatprep.subr.mxu0 0.0
  %887 = vmatpush1.msra.mxu0 %v872
  %888 = vmatprep.subr.mxu0 0.0
  %889 = vmatpush1.msra.mxu0 %v873
  %890 = vmatprep.subr.mxu0 0.0
  %891 = vmatpush1.msra.mxu0 %v874
  %892 = vmatprep.subr.mxu0 0.0
  %893 = vmatpush1.msra.mxu0 %v875
  %894 = vmatprep.subr.mxu0 0.0
  %895 = vmatpush1.msra.mxu0 %v876
  %896 = vmatprep.subr.mxu0 0.0
  %897 = vmatpush1.msra.mxu0 0.0
  %898 = vmatprep.subr.mxu0 0.0
  %899 = vmatpush1.msra.mxu0 0.0
  %900 = vmatprep.subr.mxu0 0.0
  %901 = vmatpush1.msra.mxu0 0.0
  %902 = vmatprep.subr.mxu0 0.0
  %903 = vmatpush1.msra.mxu0 0.0
  %904 = vmatprep.subr.mxu0 0.0
  %905 = vmatpush1.msra.mxu0 0.0
  %906 = vmatprep.subr.mxu0 0.0
  %907 = vmatpush1.msra.mxu0 0.0
  %908 = vmatprep.subr.mxu0 0.0
  %909 = vmatpush1.msra.mxu0 0.0
  %910 = vmatprep.subr.mxu0 0.0
  %911 = vmatpush1.msra.mxu0 0.0
  %912 = vmatprep.subr.mxu0 0.0
  %913 = vmatpush1.msra.mxu0 0.0
  %914 = vmatprep.subr.mxu0 0.0
  %915 = vmatpush1.msra.mxu0 0.0
  %916 = vmatprep.subr.mxu0 0.0
  %917 = vmatpush1.msra.mxu0 0.0
  %918 = vmatprep.subr.mxu0 0.0
  %919 = vmatpush1.msra.mxu0 0.0
  %920 = vmatprep.subr.mxu0 0.0
  %921 = vmatpush1.msra.mxu0 0.0
  %922 = vmatprep.subr.mxu0 0.0
  %923 = vmatpush1.msra.mxu0 0.0
  %924 = vmatprep.subr.mxu0 0.0
  %925 = vmatpush1.msra.mxu0 0.0
  %926 = vmatprep.subr.mxu0 0.0
  %927 = vmatpush1.msra.mxu0 0.0
  %928 = vmatprep.subr.mxu0 0.0
  %929 = vmatpush1.msra.mxu0 0.0
  %930 = vmatprep.subr.mxu0 0.0
  %931 = vmatpush1.msra.mxu0 0.0
  %932 = vmatprep.subr.mxu0 0.0
  %933 = vmatpush1.msra.mxu0 0.0
  %934 = vmatprep.subr.mxu0 0.0
  %935 = vmatpush1.msra.mxu0 0.0
  %936 = vmatprep.subr.mxu0 0.0
  %937 = vmatpush1.msra.mxu0 0.0
  %938 = vmatprep.subr.mxu0 0.0
  %939 = vmatpush1.msra.mxu0 0.0
  %940 = vmatprep.subr.mxu0 0.0
  %941 = vmatpush1.msra.mxu0 0.0
  %942 = vmatprep.subr.mxu0 0.0
  %943 = vmatpush1.msra.mxu0 0.0
  %944 = vmatprep.mubr.f32.mxu0 0.0
  %945 = vmatmul.mubr.f32.gmra.mrb[0].mxu0 %v878
  %v946 = vpop.f32.mrb[0].mxu0
  %v947 = vadd.f32 0.0, %v946
  %v948 = vpop.f32.mrb[0].mxu0
  %949 = vdwg.mxu0
  %v950 = vadd.f32 %v867, %v947
  %951 = vst.msk [vmem:[#allocation3] sm:$0x3] %vm222, %v950
  %v952 = vld [vmem:[#allocation3] sm:$0x3]
  %v953 = vld [vmem:[%s5] sm:$0x3]
  %v954 = vmul.f32 %v952, 0.5
  %v955 = vmul.f32 %v954, 1.442695
  %v956 = vpow.pop %v955
  %958 = vrot.lane.b32.xlu0 %v956, 96
  %v959 = vpop.permute.xlu0 %958
  %v961 = vmul.f32 %v953, %v959
  %v962 = vadd.f32 %v952, %v961
  %v963 = vld [vmem:[%s6] sm:$0xff]
  %v964 = vld [vmem:[%s6 + $0x8] sm:$0xff]
  %v965 = vld [vmem:[%s6 + $0x10] sm:$0xff]
  %v966 = vld [vmem:[%s6 + $0x18] sm:$0xff]
  %v967 = vld [vmem:[%s6 + $0x20] sm:$0xff]
  %v968 = vld [vmem:[%s6 + $0x28] sm:$0xff]
  %v969 = vld [vmem:[%s6 + $0x30] sm:$0xff]
  %v970 = vld [vmem:[%s6 + $0x38] sm:$0xff]
  %v971 = vld [vmem:[%s6 + $0x40] sm:$0xff]
  %v972 = vld [vmem:[%s6 + $0x48] sm:$0xff]
  %v973 = vld [vmem:[%s6 + $0x50] sm:$0xff]
  %v974 = vld [vmem:[%s6 + $0x58] sm:$0xff]
  %v975 = vld [vmem:[%s6 + $0x60] sm:$0xff]
  %v976 = vld [vmem:[%s6 + $0x68] sm:$0xff]
  %v977 = vld [vmem:[%s6 + $0x70] sm:$0xff]
  %v978 = vld [vmem:[%s6 + $0x78] sm:$0xff]
  %v979 = vld [vmem:[%s6 + $0x80] sm:$0xff]
  %v980 = vld [vmem:[%s6 + $0x88] sm:$0xff]
  %v981 = vld [vmem:[%s6 + $0x90] sm:$0xff]
  %v982 = vld [vmem:[%s6 + $0x98] sm:$0xff]
  %v983 = vld [vmem:[%s6 + $0xa0] sm:$0xff]
  %v984 = vld [vmem:[%s6 + $0xa8] sm:$0xff]
  %v985 = vld [vmem:[%s6 + $0xb0] sm:$0xff]
  %v986 = vld [vmem:[%s6 + $0xb8] sm:$0xff]
  %v987 = vld [vmem:[%s6 + $0xc0] sm:$0xff]
  %v988 = vld [vmem:[%s6 + $0xc8] sm:$0xff]
  %v989 = vld [vmem:[%s6 + $0xd0] sm:$0xff]
  %v990 = vld [vmem:[%s6 + $0xd8] sm:$0xff]
  %v991 = vld [vmem:[%s6 + $0xe0] sm:$0xff]
  %v992 = vld [vmem:[%s6 + $0xe8] sm:$0xff]
  %v993 = vld [vmem:[%s6 + $0xf0] sm:$0xff]
  %v994 = vld [vmem:[%s6 + $0xf8] sm:$0xff]
  %v995 = vld [vmem:[%s7] sm:$0xff]
  %v997 = vlaneseq
  %v998 = vshrl.u32 %v997, 7
  %v999 = vsub.s32 0, %v998
  %v1000 = vrot.slane %v995, %v999
  %v1001 = vlaneseq
  %v1002 = vshrl.u32 %v1001, 7
  %v1003 = vsub.s32 1, %v1002
  %v1004 = vrot.slane %v995, %v1003
  %v1005 = vlaneseq
  %v1006 = vshrl.u32 %v1005, 7
  %v1007 = vsub.s32 2, %v1006
  %v1008 = vrot.slane %v995, %v1007
  %v1009 = vlaneseq
  %v1010 = vshrl.u32 %v1009, 7
  %v1011 = vsub.s32 3, %v1010
  %v1012 = vrot.slane %v995, %v1011
  %v1013 = vlaneseq
  %v1014 = vshrl.u32 %v1013, 7
  %v1015 = vsub.s32 4, %v1014
  %v1016 = vrot.slane %v995, %v1015
  %v1017 = vlaneseq
  %v1018 = vshrl.u32 %v1017, 7
  %v1019 = vsub.s32 5, %v1018
  %v1020 = vrot.slane %v995, %v1019
  %v1021 = vlaneseq
  %v1022 = vshrl.u32 %v1021, 7
  %v1023 = vsub.s32 6, %v1022
  %v1024 = vrot.slane %v995, %v1023
  %v1025 = vlaneseq
  %v1026 = vshrl.u32 %v1025, 7
  %v1027 = vsub.s32 7, %v1026
  %v1028 = vrot.slane %v995, %v1027
  %vm1037 = vcmask 261120
  %v1039 = vsel %vm1037, %v962, 0
  %1041 = vmatprep.subr.mxu0 %v964
  %1042 = vmatpush1.msra.mxu0 %v963
  %1043 = vmatprep.subr.mxu0 %v972
  %1044 = vmatpush1.msra.mxu0 %v971
  %1045 = vmatprep.subr.mxu0 %v980
  %1046 = vmatpush1.msra.mxu0 %v979
  %1047 = vmatprep.subr.mxu0 %v988
  %1048 = vmatpush1.msra.mxu0 %v987
  %1049 = vmatprep.subr.mxu0 0.0
  %1050 = vmatpush1.msra.mxu0 0.0
  %1051 = vmatprep.subr.mxu0 0.0
  %1052 = vmatpush1.msra.mxu0 0.0
  %1053 = vmatprep.subr.mxu0 0.0
  %1054 = vmatpush1.msra.mxu0 0.0
  %1055 = vmatprep.subr.mxu0 0.0
  %1056 = vmatpush1.msra.mxu0 0.0
  %1057 = vmatprep.subr.mxu0 0.0
  %1058 = vmatpush1.msra.mxu0 0.0
  %1059 = vmatprep.subr.mxu0 0.0
  %1060 = vmatpush1.msra.mxu0 0.0
  %1061 = vmatprep.subr.mxu0 0.0
  %1062 = vmatpush1.msra.mxu0 0.0
  %1063 = vmatprep.subr.mxu0 0.0
  %1064 = vmatpush1.msra.mxu0 0.0
  %1065 = vmatprep.subr.mxu0 0.0
  %1066 = vmatpush1.msra.mxu0 0.0
  %1067 = vmatprep.subr.mxu0 0.0
  %1068 = vmatpush1.msra.mxu0 0.0
  %1069 = vmatprep.subr.mxu0 0.0
  %1070 = vmatpush1.msra.mxu0 0.0
  %1071 = vmatprep.subr.mxu0 0.0
  %1072 = vmatpush1.msra.mxu0 0.0
  %1073 = vmatprep.subr.mxu0 0.0
  %1074 = vmatpush1.msra.mxu0 0.0
  %1075 = vmatprep.subr.mxu0 0.0
  %1076 = vmatpush1.msra.mxu0 0.0
  %1077 = vmatprep.subr.mxu0 0.0
  %1078 = vmatpush1.msra.mxu0 0.0
  %1079 = vmatprep.subr.mxu0 0.0
  %1080 = vmatpush1.msra.mxu0 0.0
  %1081 = vmatprep.subr.mxu0 0.0
  %1082 = vmatpush1.msra.mxu0 0.0
  %1083 = vmatprep.subr.mxu0 0.0
  %1084 = vmatpush1.msra.mxu0 0.0
  %1085 = vmatprep.subr.mxu0 0.0
  %1086 = vmatpush1.msra.mxu0 0.0
  %1087 = vmatprep.subr.mxu0 0.0
  %1088 = vmatpush1.msra.mxu0 0.0
  %1089 = vmatprep.subr.mxu0 0.0
  %1090 = vmatpush1.msra.mxu0 0.0
  %1091 = vmatprep.subr.mxu0 0.0
  %1092 = vmatpush1.msra.mxu0 0.0
  %1093 = vmatprep.subr.mxu0 0.0
  %1094 = vmatpush1.msra.mxu0 0.0
  %1095 = vmatprep.subr.mxu0 0.0
  %1096 = vmatpush1.msra.mxu0 0.0
  %1097 = vmatprep.subr.mxu0 0.0
  %1098 = vmatpush1.msra.mxu0 0.0
  %1099 = vmatprep.subr.mxu0 0.0
  %1100 = vmatpush1.msra.mxu0 0.0
  %1101 = vmatprep.subr.mxu0 0.0
  %1102 = vmatpush1.msra.mxu0 0.0
  %1103 = vmatprep.subr.mxu0 0.0
  %1104 = vmatpush1.msra.mxu0 0.0
  %1105 = vmatprep.mubr.f32.mxu0 0.0
  %1106 = vmatmul.mubr.f32.gmra.mrb[0].mxu0 %v1039
  %v1107 = vpop.f32.mrb[0].mxu0
  %v1108 = vadd.f32 %v1000, %v1107
  %v1109 = vpop.f32.mrb[0].mxu0
  %v1110 = vadd.f32 %v1004, %v1109
  %1111 = vdwg.mxu0
  %1112 = vmatprep.subr.mxu0 %v966
  %1113 = vmatpush1.msra.mxu0 %v965
  %1114 = vmatprep.subr.mxu0 %v974
  %1115 = vmatpush1.msra.mxu0 %v973
  %1116 = vmatprep.subr.mxu0 %v982
  %1117 = vmatpush1.msra.mxu0 %v981
  %1118 = vmatprep.subr.mxu0 %v990
  %1119 = vmatpush1.msra.mxu0 %v989
  %1120 = vmatprep.subr.mxu0 0.0
  %1121 = vmatpush1.msra.mxu0 0.0
  %1122 = vmatprep.subr.mxu0 0.0
  %1123 = vmatpush1.msra.mxu0 0.0
  %1124 = vmatprep.subr.mxu0 0.0
  %1125 = vmatpush1.msra.mxu0 0.0
  %1126 = vmatprep.subr.mxu0 0.0
  %1127 = vmatpush1.msra.mxu0 0.0
  %1128 = vmatprep.subr.mxu0 0.0
  %1129 = vmatpush1.msra.mxu0 0.0
  %1130 = vmatprep.subr.mxu0 0.0
  %1131 = vmatpush1.msra.mxu0 0.0
  %1132 = vmatprep.subr.mxu0 0.0
  %1133 = vmatpush1.msra.mxu0 0.0
  %1134 = vmatprep.subr.mxu0 0.0
  %1135 = vmatpush1.msra.mxu0 0.0
  %1136 = vmatprep.subr.mxu0 0.0
  %1137 = vmatpush1.msra.mxu0 0.0
  %1138 = vmatprep.subr.mxu0 0.0
  %1139 = vmatpush1.msra.mxu0 0.0
  %1140 = vmatprep.subr.mxu0 0.0
  %1141 = vmatpush1.msra.mxu0 0.0
  %1142 = vmatprep.subr.mxu0 0.0
  %1143 = vmatpush1.msra.mxu0 0.0
  %1144 = vmatprep.subr.mxu0 0.0
  %1145 = vmatpush1.msra.mxu0 0.0
  %1146 = vmatprep.subr.mxu0 0.0
  %1147 = vmatpush1.msra.mxu0 0.0
  %1148 = vmatprep.subr.mxu0 0.0
  %1149 = vmatpush1.msra.mxu0 0.0
  %1150 = vmatprep.subr.mxu0 0.0
  %1151 = vmatpush1.msra.mxu0 0.0
  %1152 = vmatprep.subr.mxu0 0.0
  %1153 = vmatpush1.msra.mxu0 0.0
  %1154 = vmatprep.subr.mxu0 0.0
  %1155 = vmatpush1.msra.mxu0 0.0
  %1156 = vmatprep.subr.mxu0 0.0
  %1157 = vmatpush1.msra.mxu0 0.0
  %1158 = vmatprep.subr.mxu0 0.0
  %1159 = vmatpush1.msra.mxu0 0.0
  %1160 = vmatprep.subr.mxu0 0.0
  %1161 = vmatpush1.msra.mxu0 0.0
  %1162 = vmatprep.subr.mxu0 0.0
  %1163 = vmatpush1.msra.mxu0 0.0
  %1164 = vmatprep.subr.mxu0 0.0
  %1165 = vmatpush1.msra.mxu0 0.0
  %1166 = vmatprep.subr.mxu0 0.0
  %1167 = vmatpush1.msra.mxu0 0.0
  %1168 = vmatprep.subr.mxu0 0.0
  %1169 = vmatpush1.msra.mxu0 0.0
  %1170 = vmatprep.subr.mxu0 0.0
  %1171 = vmatpush1.msra.mxu0 0.0
  %1172 = vmatprep.subr.mxu0 0.0
  %1173 = vmatpush1.msra.mxu0 0.0
  %1174 = vmatprep.subr.mxu0 0.0
  %1175 = vmatpush1.msra.mxu0 0.0
  %1176 = vmatprep.mubr.f32.mxu0 0.0
  %1177 = vmatmul.mubr.f32.gmra.mrb[0].mxu0 %v1039
  %v1178 = vpop.f32.mrb[0].mxu0
  %v1179 = vadd.f32 %v1008, %v1178
  %v1180 = vpop.f32.mrb[0].mxu0
  %v1181 = vadd.f32 %v1012, %v1180
  %1182 = vdwg.mxu0
  %1183 = vmatprep.subr.mxu0 %v968
  %1184 = vmatpush1.msra.mxu0 %v967
  %1185 = vmatprep.subr.mxu0 %v976
  %1186 = vmatpush1.msra.mxu0 %v975
  %1187 = vmatprep.subr.mxu0 %v984
  %1188 = vmatpush1.msra.mxu0 %v983
  %1189 = vmatprep.subr.mxu0 %v992
  %1190 = vmatpush1.msra.mxu0 %v991
  %1191 = vmatprep.subr.mxu0 0.0
  %1192 = vmatpush1.msra.mxu0 0.0
  %1193 = vmatprep.subr.mxu0 0.0
  %1194 = vmatpush1.msra.mxu0 0.0
  %1195 = vmatprep.subr.mxu0 0.0
  %1196 = vmatpush1.msra.mxu0 0.0
  %1197 = vmatprep.subr.mxu0 0.0
  %1198 = vmatpush1.msra.mxu0 0.0
  %1199 = vmatprep.subr.mxu0 0.0
  %1200 = vmatpush1.msra.mxu0 0.0
  %1201 = vmatprep.subr.mxu0 0.0
  %1202 = vmatpush1.msra.mxu0 0.0
  %1203 = vmatprep.subr.mxu0 0.0
  %1204 = vmatpush1.msra.mxu0 0.0
  %1205 = vmatprep.subr.mxu0 0.0
  %1206 = vmatpush1.msra.mxu0 0.0
  %1207 = vmatprep.subr.mxu0 0.0
  %1208 = vmatpush1.msra.mxu0 0.0
  %1209 = vmatprep.subr.mxu0 0.0
  %1210 = vmatpush1.msra.mxu0 0.0
  %1211 = vmatprep.subr.mxu0 0.0
  %1212 = vmatpush1.msra.mxu0 0.0
  %1213 = vmatprep.subr.mxu0 0.0
  %1214 = vmatpush1.msra.mxu0 0.0
  %1215 = vmatprep.subr.mxu0 0.0
  %1216 = vmatpush1.msra.mxu0 0.0
  %1217 = vmatprep.subr.mxu0 0.0
  %1218 = vmatpush1.msra.mxu0 0.0
  %1219 = vmatprep.subr.mxu0 0.0
  %1220 = vmatpush1.msra.mxu0 0.0
  %1221 = vmatprep.subr.mxu0 0.0
  %1222 = vmatpush1.msra.mxu0 0.0
  %1223 = vmatprep.subr.mxu0 0.0
  %1224 = vmatpush1.msra.mxu0 0.0
  %1225 = vmatprep.subr.mxu0 0.0
  %1226 = vmatpush1.msra.mxu0 0.0
  %1227 = vmatprep.subr.mxu0 0.0
  %1228 = vmatpush1.msra.mxu0 0.0
  %1229 = vmatprep.subr.mxu0 0.0
  %1230 = vmatpush1.msra.mxu0 0.0
  %1231 = vmatprep.subr.mxu0 0.0
  %1232 = vmatpush1.msra.mxu0 0.0
  %1233 = vmatprep.subr.mxu0 0.0
  %1234 = vmatpush1.msra.mxu0 0.0
  %1235 = vmatprep.subr.mxu0 0.0
  %1236 = vmatpush1.msra.mxu0 0.0
  %1237 = vmatprep.subr.mxu0 0.0
  %1238 = vmatpush1.msra.mxu0 0.0
  %1239 = vmatprep.subr.mxu0 0.0
  %1240 = vmatpush1.msra.mxu0 0.0
  %1241 = vmatprep.subr.mxu0 0.0
  %1242 = vmatpush1.msra.mxu0 0.0
  %1243 = vmatprep.subr.mxu0 0.0
  %1244 = vmatpush1.msra.mxu0 0.0
  %1245 = vmatprep.subr.mxu0 0.0
  %1246 = vmatpush1.msra.mxu0 0.0
  %1247 = vmatprep.mubr.f32.mxu0 0.0
  %1248 = vmatmul.mubr.f32.gmra.mrb[0].mxu0 %v1039
  %v1249 = vpop.f32.mrb[0].mxu0
  %v1250 = vadd.f32 %v1016, %v1249
  %v1251 = vpop.f32.mrb[0].mxu0
  %v1252 = vadd.f32 %v1020, %v1251
  %1253 = vdwg.mxu0
  %1254 = vmatprep.subr.mxu0 %v970
  %1255 = vmatpush1.msra.mxu0 %v969
  %1256 = vmatprep.subr.mxu0 %v978
  %1257 = vmatpush1.msra.mxu0 %v977
  %1258 = vmatprep.subr.mxu0 %v986
  %1259 = vmatpush1.msra.mxu0 %v985
  %1260 = vmatprep.subr.mxu0 %v994
  %1261 = vmatpush1.msra.mxu0 %v993
  %1262 = vmatprep.subr.mxu0 0.0
  %1263 = vmatpush1.msra.mxu0 0.0
  %1264 = vmatprep.subr.mxu0 0.0
  %1265 = vmatpush1.msra.mxu0 0.0
  %1266 = vmatprep.subr.mxu0 0.0
  %1267 = vmatpush1.msra.mxu0 0.0
  %1268 = vmatprep.subr.mxu0 0.0
  %1269 = vmatpush1.msra.mxu0 0.0
  %1270 = vmatprep.subr.mxu0 0.0
  %1271 = vmatpush1.msra.mxu0 0.0
  %1272 = vmatprep.subr.mxu0 0.0
  %1273 = vmatpush1.msra.mxu0 0.0
  %1274 = vmatprep.subr.mxu0 0.0
  %1275 = vmatpush1.msra.mxu0 0.0
  %1276 = vmatprep.subr.mxu0 0.0
  %1277 = vmatpush1.msra.mxu0 0.0
  %1278 = vmatprep.subr.mxu0 0.0
  %1279 = vmatpush1.msra.mxu0 0.0
  %1280 = vmatprep.subr.mxu0 0.0
  %1281 = vmatpush1.msra.mxu0 0.0
  %1282 = vmatprep.subr.mxu0 0.0
  %1283 = vmatpush1.msra.mxu0 0.0
  %1284 = vmatprep.subr.mxu0 0.0
  %1285 = vmatpush1.msra.mxu0 0.0
  %1286 = vmatprep.subr.mxu0 0.0
  %1287 = vmatpush1.msra.mxu0 0.0
  %1288 = vmatprep.subr.mxu0 0.0
  %1289 = vmatpush1.msra.mxu0 0.0
  %1290 = vmatprep.subr.mxu0 0.0
  %1291 = vmatpush1.msra.mxu0 0.0
  %1292 = vmatprep.subr.mxu0 0.0
  %1293 = vmatpush1.msra.mxu0 0.0
  %1294 = vmatprep.subr.mxu0 0.0
  %1295 = vmatpush1.msra.mxu0 0.0
  %1296 = vmatprep.subr.mxu0 0.0
  %1297 = vmatpush1.msra.mxu0 0.0
  %1298 = vmatprep.subr.mxu0 0.0
  %1299 = vmatpush1.msra.mxu0 0.0
  %1300 = vmatprep.subr.mxu0 0.0
  %1301 = vmatpush1.msra.mxu0 0.0
  %1302 = vmatprep.subr.mxu0 0.0
  %1303 = vmatpush1.msra.mxu0 0.0
  %1304 = vmatprep.subr.mxu0 0.0
  %1305 = vmatpush1.msra.mxu0 0.0
  %1306 = vmatprep.subr.mxu0 0.0
  %1307 = vmatpush1.msra.mxu0 0.0
  %1308 = vmatprep.subr.mxu0 0.0
  %1309 = vmatpush1.msra.mxu0 0.0
  %1310 = vmatprep.subr.mxu0 0.0
  %1311 = vmatpush1.msra.mxu0 0.0
  %1312 = vmatprep.subr.mxu0 0.0
  %1313 = vmatpush1.msra.mxu0 0.0
  %1314 = vmatprep.subr.mxu0 0.0
  %1315 = vmatpush1.msra.mxu0 0.0
  %1316 = vmatprep.subr.mxu0 0.0
  %1317 = vmatpush1.msra.mxu0 0.0
  %1318 = vmatprep.mubr.f32.mxu0 0.0
  %1319 = vmatmul.mubr.f32.gmra.mrb[0].mxu0 %v1039
  %v1320 = vpop.f32.mrb[0].mxu0
  %v1321 = vadd.f32 %v1024, %v1320
  %v1322 = vpop.f32.mrb[0].mxu0
  %v1323 = vadd.f32 %v1028, %v1322
  %1324 = vdwg.mxu0
  %v1333 = vcombine.low %v1108, %v1110
  %v1334 = vcombine.low %v1179, %v1181
  %v1336 = vunpack.c.l.s4 1983009808
  %v1337 = vunpack.c.0.s8 %v1336
  %v1338 = vlaneseq
  %v1339 = vshrl.u32 %v1338, 7
  %v1340 = vsub.s32 %v1337, %v1339
  %v1341 = vrot.slane %v1333, %v1340
  %v1343 = vunpack.c.l.s4 1983009808
  %v1344 = vunpack.c.0.s8 %v1343
  %v1345 = vlaneseq
  %v1346 = vshrl.u32 %v1345, 7
  %v1347 = vsub.s32 %v1344, %v1346
  %v1348 = vrot.slane %v1334, %v1347
  %v1349 = vcombine.low %v1341, %v1348
  %v1350 = vcombine.low %v1250, %v1252
  %v1351 = vcombine.low %v1321, %v1323
  %v1353 = vunpack.c.l.s4 1983009808
  %v1354 = vunpack.c.0.s8 %v1353
  %v1355 = vlaneseq
  %v1356 = vshrl.u32 %v1355, 7
  %v1357 = vsub.s32 %v1354, %v1356
  %v1358 = vrot.slane %v1350, %v1357
  %v1360 = vunpack.c.l.s4 1983009808
  %v1361 = vunpack.c.0.s8 %v1360
  %v1362 = vlaneseq
  %v1363 = vshrl.u32 %v1362, 7
  %v1364 = vsub.s32 %v1361, %v1363
  %v1365 = vrot.slane %v1351, %v1364
  %v1366 = vcombine.low %v1358, %v1365
  %1369 = vst [vmem:[%s8] sm:$0xff] %v1349
  %1370 = vst [vmem:[%s8 + $0x8] sm:$0xff] %v1366
  %v1371 = vadd.f32 %v952, 1.0
  %v1372 = vmul.f32 %v952, %v952
  %1374 = vrot.lane.b32.xlu0 %v1372, 32
  %v1375 = vpop.permute.xlu0 %1374
  %v1377 = vsub.f32 %v1371, %v1375
  %v1378 = vmul.f32 %v952, 1.442695
  %v1379 = vpow.pop %v1378
  %v1380 = vsub.f32 %v1377, %v1379
  %1382 = vrot.lane.b32.xlu0 %v1380, 96
  %v1383 = vpop.permute.xlu0 %1382
  %vm1385 = vcmask 254976
  %v1386 = vsel %vm1385, %v1383, 0.0
  %1387 = vadd.xlane.f32.xlu0 %v1386
  %v1388 = vpop.xlane.xlu0 %1387
  %v1389 = vmul.f32 %v1388, -0.5
  %1390 = vst [vmem:[%s9] sm:$0x3] %v1389
  // Predicated region
  $region34: #{vae_forward.1} parent=0 // pred_check
    _
  $region35: #{vae_forward.1} parent=0 // pred_check_branch
    %1392 = sbr.rel (0) target = $region37
  $region36: #{vae_forward.1} parent=0 // pred_region
    _
  $region37: #{vae_forward.1} parent=0 // pred_fallthru
    _
  // Predicated region
  $region38: #{vae_forward.1} parent=0 // pred_check
    _
  $region39: #{vae_forward.1} parent=0 // pred_check_branch
    %1394 = sbr.rel (0) target = $region41
  $region40: #{vae_forward.1} parent=0 // pred_region
    _
  $region41: #{vae_forward.1} parent=0 // pred_fallthru
    _
  // Predicated region
  $region42: #{vae_forward.1} parent=0 // pred_check
    _
  $region43: #{vae_forward.1} parent=0 // pred_check_branch
    %1396 = sbr.rel (0) target = $region45
  $region44: #{vae_forward.1} parent=0 // pred_region
    _
  $region45: #{vae_forward.1} parent=0 // pred_fallthru
    _
  // Predicated region
  $region46: #{vae_forward.1} parent=0 // pred_check
    _
  $region47: #{vae_forward.1} parent=0 // pred_check_branch
    %1398 = sbr.rel (0) target = $region49
  $region48: #{vae_forward.1} parent=0 // pred_region
    _
  $region49: #{vae_forward.1} parent=0 // pred_fallthru
    _

</llo_original>
